<compile_context>
chip_gen: v6e
topology: v6e:2x2x1
jax: 0.10.0
libtpu: 0.0.40
codegen_flags: <defaults>
</compile_context>

<pallas_src>
import numpy as np

import jax
import jax.numpy as jnp
from jax.experimental import pallas as pl
from jax.experimental.pallas import tpu as pltpu


# ----------------------------------------------------------------------------- config


def _round_up(x, m):
    return -(-x // m) * m


def _vmem_limit_bytes():
    """Generation-aware scoped-VMEM limit: ~75% of per-TensorCore VMEM, capped at 100 MiB."""
    cap = 0
    try:
        cap = int(pltpu.get_tpu_info().vmem_capacity_bytes)
    except Exception:
        cap = 0
    if cap <= 0:
        try:
            kind = jax.devices()[0].device_kind.lower()
        except Exception:
            kind = ""
        # v4/v5e/v5p/v6e: 128 MiB VMEM per TensorCore; v7x: 64 MiB per TensorCore.
        if ("v4" in kind) or ("v5" in kind) or ("v6" in kind):
            cap = 128 * 1024 * 1024
        else:
            cap = 64 * 1024 * 1024
    return max(32 * 1024 * 1024, min(int(cap * 0.75), 100 * 1024 * 1024))


def _affine_dtype(compute_dtype):
    """Dtype for the fused BN-affine + LeakyReLU: stream dtype on bf16-VPU chips (v6e/v7x),
    f32 on older generations (v5e and earlier have no bf16 VALU)."""
    if np.dtype(compute_dtype) == np.dtype(np.float32):
        return jnp.float32
    try:
        kind = jax.devices()[0].device_kind.lower()
    except Exception:
        kind = ""
    if ("v2" in kind) or ("v3" in kind) or ("v4" in kind) or ("v5" in kind):
        return jnp.float32
    return compute_dtype


def _pick_tile_n(N, B, max_cin, max_cout, stream_itemsize, vmem_limit):
    """Largest lane tile (multiple of 128, dividing the 128-padded N) that fits the VMEM
    budget (double-buffered in/out streams + f32 temporaries) while keeping >= ~8 grid
    steps so megacore sharding and double-buffering have work to overlap."""
    n_pad = _round_up(N, 128)
    m = n_pad // 128

    in_item = max(4, int(stream_itemsize))      # first-layer input may be f32
    out_item = int(stream_itemsize)
    per_col = (2 * max_cin * in_item + 2 * max_cout * out_item   # double-buffered streams
               + 4 * max_cout + 4 * max_cin)                      # f32 temporaries
    budget = int(vmem_limit * 0.5)                                # headroom for weights/scratch
    cap = max(128, min(8192, budget // max(per_col, 1)))

    # keep B * n_tiles >= ~8 when N is big enough (v7x megacore + pipeline depth)
    min_tiles = -(-8 // max(B, 1))
    if m >= min_tiles:
        cap = min(cap, n_pad // min_tiles)
    cap = max(cap, 128)

    best_k = 1
    for k in range(1, cap // 128 + 1):
        if m % k == 0:
            best_k = k
    return n_pad, 128 * best_k


# ----------------------------------------------------------------------------- kernels


def _make_layer_kernel(has_prev_bn, compute_dtype, affine_dtype, neg_slope,
                       n_valid, tile_n, needs_mask):
    def kernel(*refs):
        if has_prev_bn:
            h_ref, scale_ref, shift_ref, w_ref, y_ref, stats_ref = refs
        else:
            h_ref, w_ref, y_ref, stats_ref = refs

        h = h_ref[...]                                        # (c_in, tile_n)
        if has_prev_bn:
            # Fused previous-layer BatchNorm affine + LeakyReLU (2 VPU ops via maximum).
            h = h.astype(affine_dtype)
            h = h * scale_ref[...].astype(affine_dtype) + shift_ref[...].astype(affine_dtype)
            h = jnp.maximum(h, h * neg_slope)

        # Conv1d(kernel_size=1) == per-channel matmul; N stays on the 128-lane axis.
        # Conv bias is exactly cancelled by the training-mode BatchNorm that follows,
        # so it is dropped from the kernel entirely.
        y = jnp.dot(w_ref[...].astype(compute_dtype), h.astype(compute_dtype),
                    preferred_element_type=jnp.float32)       # (c_out, tile_n) f32
        y_ref[...] = y.astype(y_ref.dtype)

        # Per-tile, per-channel partial BN statistics: lane-dense (2, c_out) in f32.
        if needs_mask:
            col = jax.lax.broadcasted_iota(jnp.int32, (1, tile_n), 1)
            valid = (pl.program_id(1) * tile_n + col) < n_valid
            y = jnp.where(valid, y, 0.0)
        s = jnp.sum(y, axis=1)                                # (c_out,)
        sq = jnp.sum(y * y, axis=1)                           # (c_out,)
        stats_ref[...] = jnp.concatenate([s[None, :], sq[None, :]], axis=0)

    return kernel


def _final_kernel(h_ref, scale_ref, shift_ref, te_ref, out_ref):
    h = h_ref[...].astype(jnp.float32)
    h = h * scale_ref[...] + shift_ref[...]                   # last BatchNorm (no activation)
    out_ref[...] = (h + te_ref[...]).astype(out_ref.dtype)    # + time emb (bcast over lanes)


def _make_time_embed_kernel(compute_dtype):
    def kernel(t_ref, w1_ref, b1_ref, w2_ref, b2_ref, out_ref):
        cd = compute_dtype
        h = jnp.dot(t_ref[...].astype(cd), w1_ref[...].astype(cd),
                    preferred_element_type=jnp.float32) + b1_ref[...]
        h = h * jax.nn.sigmoid(h)                             # SiLU in f32 (EUP)
        h = jnp.dot(h.astype(cd), w2_ref[...].astype(cd),
                    preferred_element_type=jnp.float32) + b2_ref[...]
        out_ref[...] = h.astype(out_ref.dtype)
    return kernel


# ----------------------------------------------------------------------------- wrappers


def _run_time_embed(t, w1, b1, w2, b2, compute_dtype, vmem_limit):
    B = t.shape[0]
    c_out = w2.shape[1]
    vmem = pl.BlockSpec(memory_space=pltpu.MemorySpace.VMEM)
    return pl.pallas_call(
        _make_time_embed_kernel(compute_dtype),
        out_shape=jax.ShapeDtypeStruct((B, c_out), jnp.float32),
        in_specs=[vmem] * 5,
        out_specs=vmem,
        compiler_params=pltpu.CompilerParams(vmem_limit_bytes=vmem_limit),
    )(t, w1, b1, w2, b2)


def _run_layer(h, scale, shift, w, *, tile_n, n_valid, compute_dtype, affine_dtype,
               neg_slope, vmem_limit):
    B, c_in, n_pad = h.shape
    c_out = w.shape[0]
    n_tiles = n_pad // tile_n
    has_prev = scale is not None
    needs_mask = (n_valid != n_pad)

    in_arrays = [h]
    in_specs = [pl.BlockSpec((None, c_in, tile_n), lambda bb, nn: (bb, 0, nn))]
    if has_prev:
        in_arrays += [scale, shift]
        in_specs += [pl.BlockSpec((c_in, 1), lambda bb, nn: (0, 0)),
                     pl.BlockSpec((c_in, 1), lambda bb, nn: (0, 0))]
    in_arrays += [w]
    in_specs += [pl.BlockSpec((c_out, c_in), lambda bb, nn: (0, 0))]

    out_shape = (jax.ShapeDtypeStruct((B, c_out, n_pad), compute_dtype),
                 jax.ShapeDtypeStruct((B, n_tiles, 2, c_out), jnp.float32))
    out_specs = (pl.BlockSpec((None, c_out, tile_n), lambda bb, nn: (bb, 0, nn)),
                 pl.BlockSpec((None, None, 2, c_out), lambda bb, nn: (bb, nn, 0, 0)))

    itemsize = np.dtype(compute_dtype).itemsize
    bytes_accessed = int(h.size * h.dtype.itemsize            # streamed in
                         + B * c_out * n_pad * itemsize       # streamed out
                         + w.size * w.dtype.itemsize          # resident params
                         + B * n_tiles * 2 * c_out * 4)       # stats partials
    cost = pl.CostEstimate(flops=2 * B * n_pad * c_in * c_out, transcendentals=0,
                           bytes_accessed=bytes_accessed)

    return pl.pallas_call(
        _make_layer_kernel(has_prev, compute_dtype, affine_dtype, neg_slope,
                           n_valid, tile_n, needs_mask),
        grid=(B, n_tiles),
        in_specs=in_specs,
        out_specs=out_specs,
        out_shape=out_shape,
        compiler_params=pltpu.CompilerParams(
            dimension_semantics=("parallel", "parallel"),
            vmem_limit_bytes=vmem_limit),
        cost_estimate=cost,
    )(*in_arrays)


def _run_final(h, scale, shift, te, out_dtype, *, tile_n, vmem_limit):
    B, c, n_pad = h.shape
    n_tiles = n_pad // tile_n
    return pl.pallas_call(
        _final_kernel,
        grid=(B, n_tiles),
        in_specs=[pl.BlockSpec((None, c, tile_n), lambda bb, nn: (bb, 0, nn)),
                  pl.BlockSpec((c, 1), lambda bb, nn: (0, 0)),
                  pl.BlockSpec((c, 1), lambda bb, nn: (0, 0)),
                  pl.BlockSpec((None, c, 1), lambda bb, nn: (bb, 0, 0))],
        out_specs=pl.BlockSpec((None, c, tile_n), lambda bb, nn: (bb, 0, nn)),
        out_shape=jax.ShapeDtypeStruct((B, c, n_pad), out_dtype),
        compiler_params=pltpu.CompilerParams(
            dimension_semantics=("parallel", "parallel"),
            vmem_limit_bytes=vmem_limit),
    )(h, scale, shift, te)


def _bn_scale_shift(stats, gamma, beta, count, eps):
    """Fold batch stats + BN affine into one per-channel scale/shift (tiny f32 math).
    TODO(synk): E[x^2]-E[x]^2 in f32 is cancellation-prone for very large N / large
    activation means; a Chan/Welford per-tile combine would be more robust."""
    s = jnp.sum(stats[:, :, 0, :], axis=(0, 1))               # (C,)
    sq = jnp.sum(stats[:, :, 1, :], axis=(0, 1))              # (C,)
    mean = s / count
    var = jnp.maximum(sq / count - mean * mean, 0.0)          # biased variance (training BN)
    scale = gamma * jax.lax.rsqrt(var + eps)
    shift = beta - mean * scale
    return scale.reshape(-1, 1), shift.reshape(-1, 1)


def temporal_mlp_forward(x, time_emb, params, *, compute_dtype=jnp.bfloat16,
                         eps=1e-5, neg_slope=0.02):
    """x: (B, C_in, N) (PyTorch NCL); time_emb: (B, T). Returns (B, C_out, N)."""
    B, c_in0, N = x.shape
    layers = params["layers"]

    vmem_limit = _vmem_limit_bytes()
    affine_dtype = _affine_dtype(compute_dtype)
    max_cin = max([c_in0] + [w.shape[1] for (w, _, _, _) in layers])
    max_cout = max(w.shape[0] for (w, _, _, _) in layers)
    n_pad, tile_n = _pick_tile_n(N, B, max_cin, max_cout,
                                 np.dtype(compute_dtype).itemsize, vmem_limit)
    count = float(B * N)

    # time_embed MLP: tiny (rows == batch) -> its own small un-gridded kernel.
    te = _run_time_embed(time_emb, params["tW1"], params["tb1"],
                         params["tW2"], params["tb2"], compute_dtype, vmem_limit)
    te = te.reshape(B, -1, 1)                                 # (B, C_out, 1)

    # TODO(synk): BatchNorm running_mean/running_var buffer updates are not
    # materialized (training-mode forward output does not depend on them).
    h = x if n_pad == N else jnp.pad(x, ((0, 0), (0, 0), (0, n_pad - N)))
    scale = shift = None
    for (w, b, gamma, beta) in layers:
        # Conv bias b is exactly cancelled by training-mode BN -> not passed to the kernel.
        y, stats = _run_layer(h, scale, shift, w, tile_n=tile_n, n_valid=N,
                              compute_dtype=compute_dtype, affine_dtype=affine_dtype,
                              neg_slope=neg_slope, vmem_limit=vmem_limit)
        scale, shift = _bn_scale_shift(stats, gamma, beta, count, eps)
        h = y

    out = _run_final(h, scale, shift, te, x.dtype, tile_n=tile_n, vmem_limit=vmem_limit)
    if n_pad != N:
        out = out[:, :, :N]
    return out


# ----------------------------------------------------------------------------- params / reference


def init_params(key, in_channels, hid_channels, time_emb_dim, hidden=512):
    """Deterministic synthetic parameters.
    Conv1d weight (C_out, C_in, 1) is stored squeezed as (C_out, C_in)."""
    keys = iter(jax.random.split(key, 4 * len(hid_channels) + 4))
    layers = []
    c_in = in_channels
    for c_out in hid_channels:
        w = 0.1 * jax.random.normal(next(keys), (c_out, c_in), jnp.float32)
        b = 0.1 * jax.random.normal(next(keys), (c_out, 1), jnp.float32)
        gamma = 1.0 + 0.1 * jax.random.normal(next(keys), (c_out,), jnp.float32)
        beta = 0.1 * jax.random.normal(next(keys), (c_out,), jnp.float32)
        layers.append((w, b, gamma, beta))
        c_in = c_out
    tw1 = 0.1 * jax.random.normal(next(keys), (time_emb_dim, hidden), jnp.float32)
    tb1 = 0.1 * jax.random.normal(next(keys), (1, hidden), jnp.float32)
    tw2 = 0.1 * jax.random.normal(next(keys), (hidden, c_in), jnp.float32)
    tb2 = 0.1 * jax.random.normal(next(keys), (1, c_in), jnp.float32)
    return {"layers": layers, "tW1": tw1, "tb1": tb1, "tW2": tw2, "tb2": tb2}


def reference_forward(x, time_emb, params, eps=1e-5, neg_slope=0.02):
    """Pure-JAX reference mirroring the PyTorch forward (training-mode BN), NCL layout."""
    h = x.astype(jnp.float32)
    layers = params["layers"]
    for i, (w, b, gamma, beta) in enumerate(layers):
        h = jnp.einsum("oc,bcn->bon", w, h) + b[None]         # Conv1d(k=1), with bias
        mean = jnp.mean(h, axis=(0, 2), keepdims=True)
        var = jnp.mean((h - mean) ** 2, axis=(0, 2), keepdims=True)
        h = (h - mean) / jnp.sqrt(var + eps)
        h = h * gamma.reshape(1, -1, 1) + beta.reshape(1, -1, 1)
        if i < len(layers) - 1:
            h = jnp.where(h >= 0, h, neg_slope * h)
    te = time_emb @ params["tW1"] + params["tb1"]
    te = te * jax.nn.sigmoid(te)
    te = te @ params["tW2"] + params["tb2"]
    return h + te[:, :, None]


if __name__ == "__main__":
    B, C_IN, N = 2, 4, 16
    HID_CHANNELS = (32, 64)
    TIME_EMB_DIM = 8

    key = jax.random.PRNGKey(0)
    k_x, k_t, k_p = jax.random.split(key, 3)
    x = jax.random.normal(k_x, (B, C_IN, N), jnp.float32)             # PyTorch NCL
    time_emb = jax.random.normal(k_t, (B, TIME_EMB_DIM), jnp.float32)
    params = init_params(k_p, C_IN, HID_CHANNELS, TIME_EMB_DIM)

    fwd = jax.jit(temporal_mlp_forward, static_argnames=("compute_dtype",))
    ref = reference_forward(x, time_emb, params)

    # tight numerical check with f32 matmuls
    out_f32 = jax.block_until_ready(fwd(x, time_emb, params, compute_dtype=jnp.float32))
    assert out_f32.shape == (B, HID_CHANNELS[-1], N), out_f32.shape
    err_f32 = float(jnp.max(jnp.abs(out_f32 - ref)))
    assert jnp.allclose(out_f32, ref, rtol=2e-3, atol=2e-3), f"f32 mismatch, max|d|={err_f32}"

    # default fast path: bf16 MXU operands / bf16 streamed intermediates, f32 accumulation
    out_bf = jax.block_until_ready(fwd(x, time_emb, params))
    assert out_bf.shape == (B, HID_CHANNELS[-1], N), out_bf.shape
    err_bf = float(jnp.max(jnp.abs(out_bf - ref)))
    assert jnp.allclose(out_bf, ref, rtol=5e-2, atol=5e-2), f"bf16 mismatch, max|d|={err_bf}"

    print("KERNEL_OK")
</pallas_src>

<mosaic_0001>
module attributes {stable_mosaic.version = 11 : i64} {
  func.func @kernel(%arg0: i32, %arg1: i32, %arg2: memref<1x4x128xf32, #tpu.memory_space<vmem>>, %arg3: memref<32x4xf32, #tpu.memory_space<vmem>>, %arg4: memref<1x32x128xf32, #tpu.memory_space<vmem>>, %arg5: memref<1x1x2x32xf32, #tpu.memory_space<vmem>>) attributes {dimension_semantics = [#tpu.dimension_semantics<parallel>, #tpu.dimension_semantics<parallel>], iteration_bounds = array<i64: 2, 1>, scalar_prefetch = 0 : i64, scratch_operands = 0 : i64, tpu.core_type = #tpu.core_type<tc>, window_params = [{transform_indices = @transform_0, window_bounds = array<i64: 1, 4, 128>}, {pipeline_mode = #tpu.pipeline_mode<synchronous>, transform_indices = @transform_1, window_bounds = array<i64: 32, 4>}, {transform_indices = @transform_2, window_bounds = array<i64: 1, 32, 128>}, {transform_indices = @transform_3, window_bounds = array<i64: 1, 1, 2, 32>}]} {
    %c0 = arith.constant 0 : index
    %c0_0 = arith.constant 0 : index
    %c0_1 = arith.constant 0 : index
    %0 = vector.load %arg2[%c0, %c0_0, %c0_1] : memref<1x4x128xf32, #tpu.memory_space<vmem>>, vector<1x4x128xf32>
    %1 = vector.shape_cast %0 : vector<1x4x128xf32> to vector<4x128xf32>
    %c0_2 = arith.constant 0 : index
    %c0_3 = arith.constant 0 : index
    %2 = vector.load %arg3[%c0_2, %c0_3] : memref<32x4xf32, #tpu.memory_space<vmem>>, vector<32x4xf32>
    %cst = arith.constant dense<0.000000e+00> : vector<32x128xf32>
    %3 = tpu.matmul %2, %1, %cst {dimension_numbers = #tpu.dot_dimension_numbers<[1], [0], [0], [1], [0, 0, 1, 1], [], []>} : vector<32x4xf32>, vector<4x128xf32>, vector<32x128xf32> -> vector<32x128xf32>
    %c0_4 = arith.constant 0 : index
    %c0_5 = arith.constant 0 : index
    %c0_6 = arith.constant 0 : index
    %4 = vector.load %arg4[%c0_4, %c0_5, %c0_6] : memref<1x32x128xf32, #tpu.memory_space<vmem>>, vector<1x32x128xf32>
    %5 = vector.shape_cast %4 : vector<1x32x128xf32> to vector<32x128xf32>
    %6 = vector.shape_cast %3 : vector<32x128xf32> to vector<1x32x128xf32>
    tpu.vector_store %arg4[%c0_4, %c0_5, %c0_6], %6 {strides = array<i32>} : memref<1x32x128xf32, #tpu.memory_space<vmem>>, vector<1x32x128xf32>,
    %7 = tpu.iota {dimensions = array<i32: 1>} : vector<1x128xi32>
    %c128_i32 = arith.constant 128 : i32
    %8 = arith.muli %arg1, %c128_i32 : i32
    %9 = vector.broadcast %8 : i32 to vector<1x128xi32>
    %10 = arith.addi %9, %7 : vector<1x128xi32>
    %c16_i32 = arith.constant 16 : i32
    %11 = vector.broadcast %c16_i32 : i32 to vector<1x128xi32>
    %12 = arith.cmpi slt, %10, %11 : vector<1x128xi32>
    %cst_7 = arith.constant 0.000000e+00 : f32
    %13 = vector.shape_cast %12 : vector<1x128xi1> to vector<1x128xi1>
    %14 = vector.broadcast %13 : vector<1x128xi1> to vector<32x128xi1>
    %15 = vector.broadcast %cst_7 : f32 to vector<32x128xf32>
    %16 = arith.select %14, %3, %15 : vector<32x128xi1>, vector<32x128xf32>
    %cst_8 = arith.constant dense<0.000000e+00> : vector<32xf32>
    %17 = vector.multi_reduction <add>, %16, %cst_8 [1] : vector<32x128xf32> to vector<32xf32>
    %18 = arith.mulf %16, %16 : vector<32x128xf32>
    %cst_9 = arith.constant dense<0.000000e+00> : vector<32xf32>
    %19 = vector.multi_reduction <add>, %18, %cst_9 [1] : vector<32x128xf32> to vector<32xf32>
    %20 = vector.shape_cast %17 : vector<32xf32> to vector<1x32xf32>
    %21 = vector.shape_cast %19 : vector<32xf32> to vector<1x32xf32>
    %22 = tpu.concatenate %20, %21 in 0 : vector<1x32xf32>, vector<1x32xf32> -> vector<2x32xf32>
    %c0_10 = arith.constant 0 : index
    %c0_11 = arith.constant 0 : index
    %c0_12 = arith.constant 0 : index
    %c0_13 = arith.constant 0 : index
    %23 = vector.load %arg5[%c0_10, %c0_11, %c0_12, %c0_13] : memref<1x1x2x32xf32, #tpu.memory_space<vmem>>, vector<1x1x2x32xf32>
    %24 = vector.shape_cast %23 : vector<1x1x2x32xf32> to vector<2x32xf32>
    %25 = vector.shape_cast %22 : vector<2x32xf32> to vector<1x1x2x32xf32>
    tpu.vector_store %arg5[%c0_10, %c0_11, %c0_12, %c0_13], %25 {strides = array<i32>} : memref<1x1x2x32xf32, #tpu.memory_space<vmem>>, vector<1x1x2x32xf32>,
    return
  }
  func.func @transform_0(%arg0: i32, %arg1: i32) -> (i32, i32, i32) {
    %c0_i32 = arith.constant 0 : i32
    %c0_i32_0 = arith.constant 0 : i32
    return %arg0, %c0_i32, %arg1 : i32, i32, i32
  }
  func.func @transform_1(%arg0: i32, %arg1: i32) -> (i32, i32) {
    %c0_i32 = arith.constant 0 : i32
    %c0_i32_0 = arith.constant 0 : i32
    %c0_i32_1 = arith.constant 0 : i32
    return %c0_i32, %c0_i32_0 : i32, i32
  }
  func.func @transform_2(%arg0: i32, %arg1: i32) -> (i32, i32, i32) {
    %c0_i32 = arith.constant 0 : i32
    %c0_i32_0 = arith.constant 0 : i32
    return %arg0, %c0_i32, %arg1 : i32, i32, i32
  }
  func.func @transform_3(%arg0: i32, %arg1: i32) -> (i32, i32, i32, i32) {
    %c0_i32 = arith.constant 0 : i32
    %c0_i32_0 = arith.constant 0 : i32
    %c0_i32_1 = arith.constant 0 : i32
    return %arg0, %arg1, %c0_i32, %c0_i32_0 : i32, i32, i32, i32
  }
}

module attributes {stable_mosaic.version = 11 : i64} {
  func.func @kernel(%arg0: i32, %arg1: i32, %arg2: memref<1x32x128xf32, #tpu.memory_space<vmem>>, %arg3: memref<32x1xf32, #tpu.memory_space<vmem>>, %arg4: memref<32x1xf32, #tpu.memory_space<vmem>>, %arg5: memref<64x32xf32, #tpu.memory_space<vmem>>, %arg6: memref<1x64x128xf32, #tpu.memory_space<vmem>>, %arg7: memref<1x1x2x64xf32, #tpu.memory_space<vmem>>) attributes {dimension_semantics = [#tpu.dimension_semantics<parallel>, #tpu.dimension_semantics<parallel>], iteration_bounds = array<i64: 2, 1>, scalar_prefetch = 0 : i64, scratch_operands = 0 : i64, tpu.core_type = #tpu.core_type<tc>, window_params = [{transform_indices = @transform_0, window_bounds = array<i64: 1, 32, 128>}, {pipeline_mode = #tpu.pipeline_mode<synchronous>, transform_indices = @transform_1, window_bounds = array<i64: 32, 1>}, {pipeline_mode = #tpu.pipeline_mode<synchronous>, transform_indices = @transform_2, window_bounds = array<i64: 32, 1>}, {pipeline_mode = #tpu.pipeline_mode<synchronous>, transform_indices = @transform_3, window_bounds = array<i64: 64, 32>}, {transform_indices = @transform_4, window_bounds = array<i64: 1, 64, 128>}, {transform_indices = @transform_5, window_bounds = array<i64: 1, 1, 2, 64>}]} {
    %c0 = arith.constant 0 : index
    %c0_0 = arith.constant 0 : index
    %c0_1 = arith.constant 0 : index
    %0 = vector.load %arg2[%c0, %c0_0, %c0_1] : memref<1x32x128xf32, #tpu.memory_space<vmem>>, vector<1x32x128xf32>
    %1 = vector.shape_cast %0 : vector<1x32x128xf32> to vector<32x128xf32>
    %c0_2 = arith.constant 0 : index
    %c0_3 = arith.constant 0 : index
    %2 = vector.load %arg3[%c0_2, %c0_3] : memref<32x1xf32, #tpu.memory_space<vmem>>, vector<32x1xf32>
    %3 = vector.broadcast %2 : vector<32x1xf32> to vector<32x128xf32>
    %4 = arith.mulf %1, %3 : vector<32x128xf32>
    %c0_4 = arith.constant 0 : index
    %c0_5 = arith.constant 0 : index
    %5 = vector.load %arg4[%c0_4, %c0_5] : memref<32x1xf32, #tpu.memory_space<vmem>>, vector<32x1xf32>
    %6 = vector.broadcast %5 : vector<32x1xf32> to vector<32x128xf32>
    %7 = arith.addf %4, %6 : vector<32x128xf32>
    %cst = arith.constant 2.000000e-02 : f32
    %8 = vector.broadcast %cst : f32 to vector<32x128xf32>
    %9 = arith.mulf %7, %8 : vector<32x128xf32>
    %10 = arith.maximumf %7, %9 : vector<32x128xf32>
    %c0_6 = arith.constant 0 : index
    %c0_7 = arith.constant 0 : index
    %11 = vector.load %arg5[%c0_6, %c0_7] : memref<64x32xf32, #tpu.memory_space<vmem>>, vector<64x32xf32>
    %cst_8 = arith.constant dense<0.000000e+00> : vector<64x128xf32>
    %12 = tpu.matmul %11, %10, %cst_8 {dimension_numbers = #tpu.dot_dimension_numbers<[1], [0], [0], [1], [0, 0, 1, 1], [], []>} : vector<64x32xf32>, vector<32x128xf32>, vector<64x128xf32> -> vector<64x128xf32>
    %c0_9 = arith.constant 0 : index
    %c0_10 = arith.constant 0 : index
    %c0_11 = arith.constant 0 : index
    %13 = vector.load %arg6[%c0_9, %c0_10, %c0_11] : memref<1x64x128xf32, #tpu.memory_space<vmem>>, vector<1x64x128xf32>
    %14 = vector.shape_cast %13 : vector<1x64x128xf32> to vector<64x128xf32>
    %15 = vector.shape_cast %12 : vector<64x128xf32> to vector<1x64x128xf32>
    tpu.vector_store %arg6[%c0_9, %c0_10, %c0_11], %15 {strides = array<i32>} : memref<1x64x128xf32, #tpu.memory_space<vmem>>, vector<1x64x128xf32>,
    %16 = tpu.iota {dimensions = array<i32: 1>} : vector<1x128xi32>
    %c128_i32 = arith.constant 128 : i32
    %17 = arith.muli %arg1, %c128_i32 : i32
    %18 = vector.broadcast %17 : i32 to vector<1x128xi32>
    %19 = arith.addi %18, %16 : vector<1x128xi32>
    %c16_i32 = arith.constant 16 : i32
    %20 = vector.broadcast %c16_i32 : i32 to vector<1x128xi32>
    %21 = arith.cmpi slt, %19, %20 : vector<1x128xi32>
    %cst_12 = arith.constant 0.000000e+00 : f32
    %22 = vector.shape_cast %21 : vector<1x128xi1> to vector<1x128xi1>
    %23 = vector.broadcast %22 : vector<1x128xi1> to vector<64x128xi1>
    %24 = vector.broadcast %cst_12 : f32 to vector<64x128xf32>
    %25 = arith.select %23, %12, %24 : vector<64x128xi1>, vector<64x128xf32>
    %cst_13 = arith.constant dense<0.000000e+00> : vector<64xf32>
    %26 = vector.multi_reduction <add>, %25, %cst_13 [1] : vector<64x128xf32> to vector<64xf32>
    %27 = arith.mulf %25, %25 : vector<64x128xf32>
    %cst_14 = arith.constant dense<0.000000e+00> : vector<64xf32>
    %28 = vector.multi_reduction <add>, %27, %cst_14 [1] : vector<64x128xf32> to vector<64xf32>
    %29 = vector.shape_cast %26 : vector<64xf32> to vector<1x64xf32>
    %30 = vector.shape_cast %28 : vector<64xf32> to vector<1x64xf32>
    %31 = tpu.concatenate %29, %30 in 0 : vector<1x64xf32>, vector<1x64xf32> -> vector<2x64xf32>
    %c0_15 = arith.constant 0 : index
    %c0_16 = arith.constant 0 : index
    %c0_17 = arith.constant 0 : index
    %c0_18 = arith.constant 0 : index
    %32 = vector.load %arg7[%c0_15, %c0_16, %c0_17, %c0_18] : memref<1x1x2x64xf32, #tpu.memory_space<vmem>>, vector<1x1x2x64xf32>
    %33 = vector.shape_cast %32 : vector<1x1x2x64xf32> to vector<2x64xf32>
    %34 = vector.shape_cast %31 : vector<2x64xf32> to vector<1x1x2x64xf32>
    tpu.vector_store %arg7[%c0_15, %c0_16, %c0_17, %c0_18], %34 {strides = array<i32>} : memref<1x1x2x64xf32, #tpu.memory_space<vmem>>, vector<1x1x2x64xf32>,
    return
  }
  func.func @transform_0(%arg0: i32, %arg1: i32) -> (i32, i32, i32) {
    %c0_i32 = arith.constant 0 : i32
    %c0_i32_0 = arith.constant 0 : i32
    return %arg0, %c0_i32, %arg1 : i32, i32, i32
  }
  func.func @transform_1(%arg0: i32, %arg1: i32) -> (i32, i32) {
    %c0_i32 = arith.constant 0 : i32
    %c0_i32_0 = arith.constant 0 : i32
    %c0_i32_1 = arith.constant 0 : i32
    return %c0_i32, %c0_i32_0 : i32, i32
  }
  func.func @transform_2(%arg0: i32, %arg1: i32) -> (i32, i32) {
    %c0_i32 = arith.constant 0 : i32
    %c0_i32_0 = arith.constant 0 : i32
    %c0_i32_1 = arith.constant 0 : i32
    return %c0_i32, %c0_i32_0 : i32, i32
  }
  func.func @transform_3(%arg0: i32, %arg1: i32) -> (i32, i32) {
    %c0_i32 = arith.constant 0 : i32
    %c0_i32_0 = arith.constant 0 : i32
    %c0_i32_1 = arith.constant 0 : i32
    return %c0_i32, %c0_i32_0 : i32, i32
  }
  func.func @transform_4(%arg0: i32, %arg1: i32) -> (i32, i32, i32) {
    %c0_i32 = arith.constant 0 : i32
    %c0_i32_0 = arith.constant 0 : i32
    return %arg0, %c0_i32, %arg1 : i32, i32, i32
  }
  func.func @transform_5(%arg0: i32, %arg1: i32) -> (i32, i32, i32, i32) {
    %c0_i32 = arith.constant 0 : i32
    %c0_i32_0 = arith.constant 0 : i32
    %c0_i32_1 = arith.constant 0 : i32
    return %arg0, %arg1, %c0_i32, %c0_i32_0 : i32, i32, i32, i32
  }
}

module attributes {stable_mosaic.version = 11 : i64} {
  func.func @kernel(%arg0: memref<2x8xf32, #tpu.memory_space<vmem>>, %arg1: memref<8x512xf32, #tpu.memory_space<vmem>>, %arg2: memref<1x512xf32, #tpu.memory_space<vmem>>, %arg3: memref<512x64xf32, #tpu.memory_space<vmem>>, %arg4: memref<1x64xf32, #tpu.memory_space<vmem>>, %arg5: memref<2x64xf32, #tpu.memory_space<vmem>>) attributes {dimension_semantics = [], scalar_prefetch = 0 : i64, scratch_operands = 0 : i64, tpu.core_type = #tpu.core_type<tc>} {
    %c0 = arith.constant 0 : index
    %c0_0 = arith.constant 0 : index
    %0 = vector.load %arg0[%c0, %c0_0] : memref<2x8xf32, #tpu.memory_space<vmem>>, vector<2x8xf32>
    %c0_1 = arith.constant 0 : index
    %c0_2 = arith.constant 0 : index
    %1 = vector.load %arg1[%c0_1, %c0_2] : memref<8x512xf32, #tpu.memory_space<vmem>>, vector<8x512xf32>
    %cst = arith.constant dense<0.000000e+00> : vector<2x512xf32>
    %2 = tpu.matmul %0, %1, %cst {dimension_numbers = #tpu.dot_dimension_numbers<[1], [0], [0], [1], [0, 0, 1, 1], [], []>} : vector<2x8xf32>, vector<8x512xf32>, vector<2x512xf32> -> vector<2x512xf32>
    %c0_3 = arith.constant 0 : index
    %c0_4 = arith.constant 0 : index
    %3 = vector.load %arg2[%c0_3, %c0_4] : memref<1x512xf32, #tpu.memory_space<vmem>>, vector<1x512xf32>
    %4 = vector.broadcast %3 : vector<1x512xf32> to vector<2x512xf32>
    %5 = arith.addf %2, %4 : vector<2x512xf32>
    %6 = arith.negf %5 : vector<2x512xf32>
    %7 = math.exp %6 : vector<2x512xf32>
    %cst_5 = arith.constant 1.000000e+00 : f32
    %8 = vector.broadcast %cst_5 : f32 to vector<2x512xf32>
    %9 = arith.addf %8, %7 : vector<2x512xf32>
    %10 = arith.divf %8, %9 : vector<2x512xf32>
    %11 = arith.mulf %5, %10 : vector<2x512xf32>
    %c0_6 = arith.constant 0 : index
    %c0_7 = arith.constant 0 : index
    %12 = vector.load %arg3[%c0_6, %c0_7] : memref<512x64xf32, #tpu.memory_space<vmem>>, vector<512x64xf32>
    %cst_8 = arith.constant dense<0.000000e+00> : vector<2x64xf32>
    %13 = tpu.matmul %11, %12, %cst_8 {dimension_numbers = #tpu.dot_dimension_numbers<[1], [0], [0], [1], [0, 0, 1, 1], [], []>} : vector<2x512xf32>, vector<512x64xf32>, vector<2x64xf32> -> vector<2x64xf32>
    %c0_9 = arith.constant 0 : index
    %c0_10 = arith.constant 0 : index
    %14 = vector.load %arg4[%c0_9, %c0_10] : memref<1x64xf32, #tpu.memory_space<vmem>>, vector<1x64xf32>
    %15 = vector.broadcast %14 : vector<1x64xf32> to vector<2x64xf32>
    %16 = arith.addf %13, %15 : vector<2x64xf32>
    %c0_11 = arith.constant 0 : index
    %c0_12 = arith.constant 0 : index
    %17 = vector.load %arg5[%c0_11, %c0_12] : memref<2x64xf32, #tpu.memory_space<vmem>>, vector<2x64xf32>
    tpu.vector_store %arg5[%c0_11, %c0_12], %16 {strides = array<i32>} : memref<2x64xf32, #tpu.memory_space<vmem>>, vector<2x64xf32>,
    return
  }
}

module attributes {stable_mosaic.version = 11 : i64} {
  func.func @_final_kernel(%arg0: i32, %arg1: i32, %arg2: memref<1x64x128xf32, #tpu.memory_space<vmem>>, %arg3: memref<64x1xf32, #tpu.memory_space<vmem>>, %arg4: memref<64x1xf32, #tpu.memory_space<vmem>>, %arg5: memref<1x64x1xf32, #tpu.memory_space<vmem>>, %arg6: memref<1x64x128xf32, #tpu.memory_space<vmem>>) attributes {dimension_semantics = [#tpu.dimension_semantics<parallel>, #tpu.dimension_semantics<parallel>], iteration_bounds = array<i64: 2, 1>, scalar_prefetch = 0 : i64, scratch_operands = 0 : i64, tpu.core_type = #tpu.core_type<tc>, window_params = [{transform_indices = @transform_0, window_bounds = array<i64: 1, 64, 128>}, {pipeline_mode = #tpu.pipeline_mode<synchronous>, transform_indices = @transform_1, window_bounds = array<i64: 64, 1>}, {pipeline_mode = #tpu.pipeline_mode<synchronous>, transform_indices = @transform_2, window_bounds = array<i64: 64, 1>}, {transform_indices = @transform_3, window_bounds = array<i64: 1, 64, 1>}, {transform_indices = @transform_4, window_bounds = array<i64: 1, 64, 128>}]} {
    %c0 = arith.constant 0 : index
    %c0_0 = arith.constant 0 : index
    %c0_1 = arith.constant 0 : index
    %0 = vector.load %arg2[%c0, %c0_0, %c0_1] : memref<1x64x128xf32, #tpu.memory_space<vmem>>, vector<1x64x128xf32>
    %1 = vector.shape_cast %0 : vector<1x64x128xf32> to vector<64x128xf32>
    %c0_2 = arith.constant 0 : index
    %c0_3 = arith.constant 0 : index
    %2 = vector.load %arg3[%c0_2, %c0_3] : memref<64x1xf32, #tpu.memory_space<vmem>>, vector<64x1xf32>
    %3 = vector.broadcast %2 : vector<64x1xf32> to vector<64x128xf32>
    %4 = arith.mulf %1, %3 : vector<64x128xf32>
    %c0_4 = arith.constant 0 : index
    %c0_5 = arith.constant 0 : index
    %5 = vector.load %arg4[%c0_4, %c0_5] : memref<64x1xf32, #tpu.memory_space<vmem>>, vector<64x1xf32>
    %6 = vector.broadcast %5 : vector<64x1xf32> to vector<64x128xf32>
    %7 = arith.addf %4, %6 : vector<64x128xf32>
    %c0_6 = arith.constant 0 : index
    %c0_7 = arith.constant 0 : index
    %c0_8 = arith.constant 0 : index
    %8 = vector.load %arg5[%c0_6, %c0_7, %c0_8] : memref<1x64x1xf32, #tpu.memory_space<vmem>>, vector<1x64x1xf32>
    %9 = vector.shape_cast %8 : vector<1x64x1xf32> to vector<64x1xf32>
    %10 = vector.broadcast %9 : vector<64x1xf32> to vector<64x128xf32>
    %11 = arith.addf %7, %10 : vector<64x128xf32>
    %c0_9 = arith.constant 0 : index
    %c0_10 = arith.constant 0 : index
    %c0_11 = arith.constant 0 : index
    %12 = vector.load %arg6[%c0_9, %c0_10, %c0_11] : memref<1x64x128xf32, #tpu.memory_space<vmem>>, vector<1x64x128xf32>
    %13 = vector.shape_cast %12 : vector<1x64x128xf32> to vector<64x128xf32>
    %14 = vector.shape_cast %11 : vector<64x128xf32> to vector<1x64x128xf32>
    tpu.vector_store %arg6[%c0_9, %c0_10, %c0_11], %14 {strides = array<i32>} : memref<1x64x128xf32, #tpu.memory_space<vmem>>, vector<1x64x128xf32>,
    return
  }
  func.func @transform_0(%arg0: i32, %arg1: i32) -> (i32, i32, i32) {
    %c0_i32 = arith.constant 0 : i32
    %c0_i32_0 = arith.constant 0 : i32
    return %arg0, %c0_i32, %arg1 : i32, i32, i32
  }
  func.func @transform_1(%arg0: i32, %arg1: i32) -> (i32, i32) {
    %c0_i32 = arith.constant 0 : i32
    %c0_i32_0 = arith.constant 0 : i32
    %c0_i32_1 = arith.constant 0 : i32
    return %c0_i32, %c0_i32_0 : i32, i32
  }
  func.func @transform_2(%arg0: i32, %arg1: i32) -> (i32, i32) {
    %c0_i32 = arith.constant 0 : i32
    %c0_i32_0 = arith.constant 0 : i32
    %c0_i32_1 = arith.constant 0 : i32
    return %c0_i32, %c0_i32_0 : i32, i32
  }
  func.func @transform_3(%arg0: i32, %arg1: i32) -> (i32, i32, i32) {
    %c0_i32 = arith.constant 0 : i32
    %c0_i32_0 = arith.constant 0 : i32
    %c0_i32_1 = arith.constant 0 : i32
    return %arg0, %c0_i32, %c0_i32_0 : i32, i32, i32
  }
  func.func @transform_4(%arg0: i32, %arg1: i32) -> (i32, i32, i32) {
    %c0_i32 = arith.constant 0 : i32
    %c0_i32_0 = arith.constant 0 : i32
    return %arg0, %c0_i32, %arg1 : i32, i32, i32
  }
}

</mosaic_0001>

<llo_original>
// kernel: temporal_mlp_forward.5
$region0: #{temporal_mlp_forward.5}
  #allocation0 [shape = 'u32[]', space=smem, size = 0x4, offset = 0x4, fixed_abs, tag = 'smem constant byte address 0x4 - core index']
  #allocation1 [shape = 'u32[144,128]{1,0:T(1,128)}', space=vmem, size = 0x12000, scoped, tag = 'internal scratch']
  %s0 = inlined_call_operand.vmem [shape: f32[2,4,128], index: 0, kind: input, shape index: {}]
  %s1 = inlined_call_operand.vmem [shape: f32[32,4], index: 1, kind: input, shape index: {}]
  %s2 = inlined_call_operand.vmem [shape: f32[2,32,128], index: 2, kind: output, shape index: {0}]
  %s3 = inlined_call_operand.vmem [shape: f32[2,1,2,32], index: 3, kind: output, shape index: {1}]
  %4 = xla_tuple %s2, %s3
  %s5 = sld [smem:[#allocation0]]
  $region49: #{temporal_mlp_forward.5} parent=0
    _
  %s7 = ssub.s32 1, %s5
  %s8 = scalar_select 0, %s7, %s5
  loop: start=0, step=1, limit=4
  $region2: #{temporal_mlp_forward.5} parent=0 // loop_pre_header
    _
  $region3: #{temporal_mlp_forward.5} parent=0 // loop_header
    %s10 = sphi 0, %s14
    %p11 = scmp.ge.s32.totalorder %s10, 4
    %s17 = sphi 0, %s29
    %s18 = sphi 0, %s25
    %s19 = sphi 0, %s17
    %s20 = sphi 0, %s18
    %s21 = sphi 0, %s19
    %s22 = sphi 0, %s20
    %s34 = sphi 0, %s36
    %s37 = sphi 0, %s34
    %s38 = sphi 0, %s37
    %s54 = sphi 0, %s38
    %s58 = sphi 0, %s58
    %s60 = sphi 0, %s58
    %s61 = sphi 0, %s60
    %s75 = sphi 0, %s61
    %s83 = sphi 0, %s85
    %s86 = sphi 0, %s83
    %s87 = sphi 0, %s86
    %s103 = sphi 0, %s87
    %s111 = sphi 0, %s113
    %s114 = sphi 0, %s111
    %s115 = sphi 0, %s114
    %s131 = sphi 0, %s115
  $region4: #{temporal_mlp_forward.5} parent=0 // loop_header_branch
    %13 = sbr.rel (%p11) target = $region8
  $region5: #{temporal_mlp_forward.5} parent=0 // loop_body
    %s15 = ssub.s32 %s10, 1
    %s16 = ssub.s32 %s10, 2
    %s23 = sadd.s32 1, %s18
    %p24 = scmp.ge.s32.totalorder %s23, 1
    %s25 = scalar_select %p24, 0, %s23
    %s26 = sadd.s32 1, %s17
    %s27 = scalar_select %p24, %s26, %s17
    %p28 = scmp.ge.s32.totalorder %s27, 2
    %s29 = scalar_select %p28, 0, %s27
    %s30 = ssub.s32 %s17, %s29
    %s31 = ssub.s32 %s18, %s25
    %s32 = sor.u32 %s30, %s31
    %p33 = scmp.eq.s32.totalorder %s32, 0
    %s35 = sadd.s32 %s34, 1
    %s36 = scalar_select %p33, %s34, %s35
    %p39 = pneg %p33
    %p40 = scmp.eq.s32.totalorder %s10, 1
    %p41 = por %p39, %p40
    %p42 = scmp.ne.s32.totalorder %s34, %s37
    %p43 = scmp.eq.s32.totalorder %s10, 0
    %p44 = por %p42, %p43
    %p45 = scmp.ne.s32.totalorder %s34, %s37
    %p46 = scmp.eq.s32.totalorder %s15, 1
    %p47 = por %p45, %p46
    %p48 = scmp.ne.s32.totalorder %s37, %s38
    %p49 = scmp.eq.s32.totalorder %s15, 0
    %p50 = por %p48, %p49
    %p51 = scmp.ne.s32.totalorder %s37, %s38
    %p52 = scmp.eq.s32.totalorder %s16, 1
    %p53 = por %p51, %p52
    %p55 = scmp.ne.s32.totalorder %s38, %s54
    %p56 = scmp.eq.s32.totalorder %s16, 0
    %p57 = por %p55, %p56
    %s59 = sadd.s32 %s58, 1
    %p62 = scmp.eq.s32.totalorder %s10, 1
    %p63 = scmp.ne.s32.totalorder %s58, %s60
    %p64 = scmp.eq.s32.totalorder %s10, 0
    %p65 = por %p63, %p64
    %p66 = scmp.ne.s32.totalorder %s58, %s60
    %p67 = scmp.eq.s32.totalorder %s15, 1
    %p68 = por %p66, %p67
    %p69 = scmp.ne.s32.totalorder %s60, %s61
    %p70 = scmp.eq.s32.totalorder %s15, 0
    %p71 = por %p69, %p70
    %p72 = scmp.ne.s32.totalorder %s60, %s61
    %p73 = scmp.eq.s32.totalorder %s16, 1
    %p74 = por %p72, %p73
    %p76 = scmp.ne.s32.totalorder %s61, %s75
    %p77 = scmp.eq.s32.totalorder %s16, 0
    %p78 = por %p76, %p77
    %s79 = ssub.s32 %s17, %s29
    %s80 = ssub.s32 %s18, %s25
    %s81 = sor.u32 %s79, %s80
    %p82 = scmp.eq.s32.totalorder %s81, 0
    %s84 = sadd.s32 %s83, 1
    %s85 = scalar_select %p82, %s83, %s84
    %p88 = pneg %p82
    %p89 = scmp.eq.s32.totalorder %s10, 1
    %p90 = por %p88, %p89
    %p91 = scmp.ne.s32.totalorder %s83, %s86
    %p92 = scmp.eq.s32.totalorder %s10, 0
    %p93 = por %p91, %p92
    %p94 = scmp.ne.s32.totalorder %s83, %s86
    %p95 = scmp.eq.s32.totalorder %s15, 1
    %p96 = por %p94, %p95
    %p97 = scmp.ne.s32.totalorder %s86, %s87
    %p98 = scmp.eq.s32.totalorder %s15, 0
    %p99 = por %p97, %p98
    %p100 = scmp.ne.s32.totalorder %s86, %s87
    %p101 = scmp.eq.s32.totalorder %s16, 1
    %p102 = por %p100, %p101
    %p104 = scmp.ne.s32.totalorder %s87, %s103
    %p105 = scmp.eq.s32.totalorder %s16, 0
    %p106 = por %p104, %p105
    %s107 = ssub.s32 %s17, %s29
    %s108 = ssub.s32 %s18, %s25
    %s109 = sor.u32 %s107, %s108
    %p110 = scmp.eq.s32.totalorder %s109, 0
    %s112 = sadd.s32 %s111, 1
    %s113 = scalar_select %p110, %s111, %s112
    %p116 = pneg %p110
    %p117 = scmp.eq.s32.totalorder %s10, 1
    %p118 = por %p116, %p117
    %p119 = scmp.ne.s32.totalorder %s111, %s114
    %p120 = scmp.eq.s32.totalorder %s10, 0
    %p121 = por %p119, %p120
    %p122 = scmp.ne.s32.totalorder %s111, %s114
    %p123 = scmp.eq.s32.totalorder %s15, 1
    %p124 = por %p122, %p123
    %p125 = scmp.ne.s32.totalorder %s114, %s115
    %p126 = scmp.eq.s32.totalorder %s15, 0
    %p127 = por %p125, %p126
    %p128 = scmp.ne.s32.totalorder %s114, %s115
    %p129 = scmp.eq.s32.totalorder %s16, 1
    %p130 = por %p128, %p129
    %p132 = scmp.ne.s32.totalorder %s115, %s131
    %p133 = scmp.eq.s32.totalorder %s16, 0
    %p134 = por %p132, %p133
    %p135 = scmp.le.s32.totalorder 1, %s10
    %p136 = scmp.lt.s32.totalorder %s10, 3
    %p137 = pnand %p135, %p136
    %p138 = pneg %p137
    // Predicated region
    $region9: #{temporal_mlp_forward.5} parent=5 // pred_check
      _
    $region10: #{temporal_mlp_forward.5} parent=5 // pred_check_branch
      %140 = sbr.rel (%p137) target = $region12
    $region11: #{temporal_mlp_forward.5} parent=5 // pred_region
      %s141 = ssub.s32 %s10, 1
      // Predicated region
      $region13: #{temporal_mlp_forward.5} parent=11 // pred_check
        %p142 = pneg %p71
      $region14: #{temporal_mlp_forward.5} parent=11 // pred_check_branch
        %144 = sbr.rel (%p142) target = $region16
      $region15: #{temporal_mlp_forward.5} parent=11 // pred_region
        _
      $region16: #{temporal_mlp_forward.5} parent=11 // pred_fallthru
        _
    $region12: #{temporal_mlp_forward.5} parent=5 // pred_fallthru
      _
    %p145 = scmp.lt.s32.totalorder %s10, 2
    // Predicated region
    $region17: #{temporal_mlp_forward.5} parent=5 // pred_check
      %p146 = pneg %p145
    $region18: #{temporal_mlp_forward.5} parent=5 // pred_check_branch
      %148 = sbr.rel (%p146) target = $region20
    $region19: #{temporal_mlp_forward.5} parent=5 // pred_region
      // Predicated region
      $region21: #{temporal_mlp_forward.5} parent=19 // pred_check
        %p149 = pneg %p44
      $region22: #{temporal_mlp_forward.5} parent=19 // pred_check_branch
        %151 = sbr.rel (%p149) target = $region24
      $region23: #{temporal_mlp_forward.5} parent=19 // pred_region
        %p152 = scmp.lt.s32.totalorder %s17, 1
        %s153 = scalar_select %p152, %s17, 1
        %p154 = scmp.lt.s32.totalorder %s18, 0
        %s155 = scalar_select %p154, %s18, 0
        %s156 = sadd.s32 %s155, %s153
        %s157 = smul.addr %s156, 4
        %s158 = scalar_lea.vmem %s0, %s157
      $region24: #{temporal_mlp_forward.5} parent=19 // pred_fallthru
        _
    $region20: #{temporal_mlp_forward.5} parent=5 // pred_fallthru
      _
    %p159 = scmp.le.s32.totalorder 1, %s10
    %p160 = scmp.lt.s32.totalorder %s10, 3
    %p161 = pnand %p159, %p160
    %p162 = pneg %p161
    // Predicated region
    $region25: #{temporal_mlp_forward.5} parent=5 // pred_check
      _
    $region26: #{temporal_mlp_forward.5} parent=5 // pred_check_branch
      %164 = sbr.rel (%p161) target = $region28
    $region27: #{temporal_mlp_forward.5} parent=5 // pred_region
      %s165 = ssub.s32 %s10, 1
      %p166 = scmp.lt.s32.totalorder %s19, 1
      %s167 = scalar_select %p166, %s19, 1
      %p168 = scmp.lt.s32.totalorder %s20, 0
      %s169 = scalar_select %p168, %s20, 0
      %s170 = sadd.s32 %s169, %s167
      %s171 = smul.addr %s170, 4
      %s172 = scalar_lea.vmem %s0, %s171
      %p173 = pneg %p50
      %p174 = pneg %p47
      %p175 = pneg %p71
      %p176 = pneg %p68
      %p177 = pneg %p99
      %p178 = pneg %p96
      %p179 = scmp.lt.s32.totalorder %s19, 1
      %s180 = scalar_select %p179, %s19, 1
      %p181 = scmp.lt.s32.totalorder %s20, 0
      %s182 = scalar_select %p181, %s20, 0
      %s183 = smul.addr %s180, 4
      %s184 = sadd.s32 %s182, %s183
      %s185 = smul.addr %s184, 8
      %s186 = scalar_lea.vmem %s2, %s185
      %p187 = pneg %p127
      %p188 = pneg %p124
      %p189 = scmp.lt.s32.totalorder %s19, 1
      %s190 = scalar_select %p189, %s19, 1
      %p191 = scmp.lt.s32.totalorder %s20, 0
      %s192 = scalar_select %p191, %s20, 0
      %s193 = sadd.s32 %s192, %s190
      %s194 = smul.addr %s193, 2
      %s195 = scalar_lea.vmem %s3, %s194
      %p196 = scmp.lt.s32.totalorder %s19, 1
      %s197 = scalar_select %p196, %s19, 1
      %p198 = scmp.lt.s32.totalorder %s20, 0
      %s199 = scalar_select %p198, %s20, 0
      %s200 = sadd.s32 %s199, %s197
      %s201 = smul.addr %s200, 4
      %s202 = scalar_lea.vmem %s0, %s201
      %p203 = scmp.lt.s32.totalorder %s19, 1
      %s204 = scalar_select %p203, %s19, 1
      %p205 = scmp.lt.s32.totalorder %s20, 0
      %s206 = scalar_select %p205, %s20, 0
      %s207 = smul.addr %s204, 4
      %s208 = sadd.s32 %s206, %s207
      %s209 = smul.addr %s208, 8
      %s210 = scalar_lea.vmem %s2, %s209
      %p211 = scmp.lt.s32.totalorder %s19, 1
      %s212 = scalar_select %p211, %s19, 1
      %p213 = scmp.lt.s32.totalorder %s20, 0
      %s214 = scalar_select %p213, %s20, 0
      %s215 = sadd.s32 %s214, %s212
      %s216 = smul.addr %s215, 2
      %s217 = scalar_lea.vmem %s3, %s216
      %v218 = vld [vmem:[%s202] sm:$0xf]
      %v219 = vld [vmem:[%s1] sm:$0xff]
      %v220 = vld [vmem:[%s1 + $0x8] sm:$0xff]
      %v221 = vld [vmem:[%s1 + $0x10] sm:$0xff]
      %v222 = vld [vmem:[%s1 + $0x18] sm:$0xff]
      %vm223 = vcmask 31744
      %v225 = vsel %vm223, %v219, 0
      %v228 = vsel %vm223, %v220, 0
      %v231 = vsel %vm223, %v221, 0
      %v234 = vsel %vm223, %v222, 0
      %vm236 = vcmask 1043456
      %v238 = vsel %vm236, %v218, 0
      %240 = vmatprep.subr.mxu0 0.0
      %241 = vmatpush1.msra.mxu0 0.0
      %242 = vmatprep.subr.mxu0 0.0
      %243 = vmatpush1.msra.mxu0 0.0
      %244 = vmatprep.subr.mxu0 0.0
      %245 = vmatpush1.msra.mxu0 0.0
      %246 = vmatprep.subr.mxu0 0.0
      %247 = vmatpush1.msra.mxu0 0.0
      %248 = vmatprep.subr.mxu0 0.0
      %249 = vmatpush1.msra.mxu0 0.0
      %250 = vmatprep.subr.mxu0 0.0
      %251 = vmatpush1.msra.mxu0 0.0
      %252 = vmatprep.subr.mxu0 0.0
      %253 = vmatpush1.msra.mxu0 0.0
      %254 = vmatprep.subr.mxu0 0.0
      %255 = vmatpush1.msra.mxu0 0.0
      %256 = vmatprep.subr.mxu0 0.0
      %257 = vmatpush1.msra.mxu0 0.0
      %258 = vmatprep.subr.mxu0 0.0
      %259 = vmatpush1.msra.mxu0 0.0
      %260 = vmatprep.subr.mxu0 0.0
      %261 = vmatpush1.msra.mxu0 0.0
      %262 = vmatprep.subr.mxu0 0.0
      %263 = vmatpush1.msra.mxu0 0.0
      %264 = vmatprep.subr.mxu0 0.0
      %265 = vmatpush1.msra.mxu0 0.0
      %266 = vmatprep.subr.mxu0 0.0
      %267 = vmatpush1.msra.mxu0 0.0
      %268 = vmatprep.subr.mxu0 0.0
      %269 = vmatpush1.msra.mxu0 0.0
      %270 = vmatprep.subr.mxu0 0.0
      %271 = vmatpush1.msra.mxu0 %v238
      %272 = vmatprep.subr.mxu0 0.0
      %273 = vmatpush2.msra.mxu0 0.0
      %274 = vmatprep.subr.mxu0 0.0
      %275 = vmatpush2.msra.mxu0 0.0
      %276 = vmatprep.subr.mxu0 0.0
      %277 = vmatpush2.msra.mxu0 0.0
      %278 = vmatprep.subr.mxu0 0.0
      %279 = vmatpush2.msra.mxu0 0.0
      %280 = vmatprep.subr.mxu0 0.0
      %281 = vmatpush2.msra.mxu0 0.0
      %282 = vmatprep.subr.mxu0 0.0
      %283 = vmatpush2.msra.mxu0 0.0
      %284 = vmatprep.subr.mxu0 0.0
      %285 = vmatpush2.msra.mxu0 0.0
      %286 = vmatprep.subr.mxu0 0.0
      %287 = vmatpush2.msra.mxu0 0.0
      %288 = vmatprep.subr.mxu0 0.0
      %289 = vmatpush2.msra.mxu0 0.0
      %290 = vmatprep.subr.mxu0 0.0
      %291 = vmatpush2.msra.mxu0 0.0
      %292 = vmatprep.subr.mxu0 0.0
      %293 = vmatpush2.msra.mxu0 0.0
      %294 = vmatprep.subr.mxu0 0.0
      %295 = vmatpush2.msra.mxu0 0.0
      %296 = vmatprep.subr.mxu0 0.0
      %297 = vmatpush2.msra.mxu0 0.0
      %298 = vmatprep.subr.mxu0 0.0
      %299 = vmatpush2.msra.mxu0 0.0
      %300 = vmatprep.subr.mxu0 0.0
      %301 = vmatpush2.msra.mxu0 0.0
      %302 = vmatprep.subr.mxu0 0.0
      %303 = vmatpush2.msra.mxu0 0.0
      %304 = vmatprep.mubr.f32.mxu0 0.0
      %305 = vmatmul.mubr.f32.gmra.mxu0 %v225
      %v306 = vpop.f32.mrf.mxu0
      %v307 = vadd.f32 0.0, %v306
      %v308 = vpop.f32.mrf.mxu0
      %309 = vmatprep.mubr.f32.mxu0 0.0
      %310 = vmatmul.mubr.f32.gmra.mxu0 %v228
      %v311 = vpop.f32.mrf.mxu0
      %v312 = vadd.f32 0.0, %v311
      %v313 = vpop.f32.mrf.mxu0
      %314 = vmatprep.mubr.f32.mxu0 0.0
      %315 = vmatmul.mubr.f32.gmra.mxu0 %v231
      %v316 = vpop.f32.mrf.mxu0
      %v317 = vadd.f32 0.0, %v316
      %v318 = vpop.f32.mrf.mxu0
      %319 = vmatprep.mubr.f32.mxu0 0.0
      %320 = vmatmul.mubr.f32.gmra.mxu0 %v234
      %v321 = vpop.f32.mrf.mxu0
      %v322 = vadd.f32 0.0, %v321
      %v323 = vpop.f32.mrf.mxu0
      %324 = vdwg.mxu0
      %325 = vst [vmem:[%s210] sm:$0xff] %v307
      %326 = vst [vmem:[%s210 + $0x8] sm:$0xff] %v312
      %327 = vst [vmem:[%s210 + $0x10] sm:$0xff] %v317
      %328 = vst [vmem:[%s210 + $0x18] sm:$0xff] %v322
      %v329 = vlaneseq
      %v330 = vand.u32 %v329, 127
      %s331 = smul.u32 %s20, 128
      %v332 = vstv %s331
      %v333 = vadd.s32 %v332, %v330
      %vm334 = vcmp.lt.s32.totalorder %v333, 16
      %v335 = vsel %vm334, 1, 0
      %vm336 = vcmp.eq.s32.totalorder %v335, 1
      %v337 = vsel %vm336, %v307, 0.0
      %v338 = vsel %vm336, %v312, 0.0
      %v339 = vsel %vm336, %v317, 0.0
      %v340 = vsel %vm336, %v322, 0.0
      %341 = vadd.xlane.f32.xlu0 %v337
      %v342 = vpop.xlane.xlu0 %341
      %343 = vadd.xlane.f32.xlu0 %v338
      %v344 = vpop.xlane.xlu0 %343
      %345 = vadd.xlane.f32.xlu0 %v339
      %v346 = vpop.xlane.xlu0 %345
      %347 = vadd.xlane.f32.xlu0 %v340
      %v348 = vpop.xlane.xlu0 %347
      %v349 = vmul.f32 %v337, %v337
      %v350 = vmul.f32 %v338, %v338
      %v351 = vmul.f32 %v339, %v339
      %v352 = vmul.f32 %v340, %v340
      %353 = vadd.xlane.f32.xlu0 %v349
      %v354 = vpop.xlane.xlu0 %353
      %355 = vadd.xlane.f32.xlu0 %v350
      %v356 = vpop.xlane.xlu0 %355
      %357 = vadd.xlane.f32.xlu0 %v351
      %v358 = vpop.xlane.xlu0 %357
      %359 = vadd.xlane.f32.xlu0 %v352
      %v360 = vpop.xlane.xlu0 %359
      %v365 = vlaneseq
      %v366 = vshrl.u32 %v365, 7
      %v367 = vsub.s32 %v330, %v366
      %v368 = vrot.slane %v342, %v367
      %v369 = vadd.s32 %v330, 4294967288
      %v370 = vlaneseq
      %v371 = vshrl.u32 %v370, 7
      %v372 = vsub.s32 %v369, %v371
      %v373 = vrot.slane %v344, %v372
      %vm374 = vcmask 130112
      %v375 = vsel %vm374, %v373, %v368
      %v376 = vadd.s32 %v330, 4294967280
      %v377 = vlaneseq
      %v378 = vshrl.u32 %v377, 7
      %v379 = vsub.s32 %v376, %v378
      %v380 = vrot.slane %v346, %v379
      %vm381 = vcmask 195712
      %v382 = vsel %vm381, %v380, %v375
      %v383 = vadd.s32 %v330, 4294967272
      %v384 = vlaneseq
      %v385 = vshrl.u32 %v384, 7
      %v386 = vsub.s32 %v383, %v385
      %v387 = vrot.slane %v348, %v386
      %vm388 = vcmask 261312
      %v389 = vsel %vm388, %v387, %v382
      %v395 = vlaneseq
      %v396 = vshrl.u32 %v395, 7
      %v397 = vsub.s32 %v330, %v396
      %v398 = vrot.slane %v354, %v397
      %v399 = vlaneseq
      %v400 = vshrl.u32 %v399, 7
      %v401 = vsub.s32 %v369, %v400
      %v402 = vrot.slane %v356, %v401
      %v403 = vsel %vm374, %v402, %v398
      %v404 = vlaneseq
      %v405 = vshrl.u32 %v404, 7
      %v406 = vsub.s32 %v376, %v405
      %v407 = vrot.slane %v358, %v406
      %v408 = vsel %vm381, %v407, %v403
      %v409 = vlaneseq
      %v410 = vshrl.u32 %v409, 7
      %v411 = vsub.s32 %v383, %v410
      %v412 = vrot.slane %v360, %v411
      %v413 = vsel %vm388, %v412, %v408
      %vm415 = vcmask 1040384
      %v416 = vsel %vm415, %v389, %v413
      %vm417 = vcmask 254976
      %418 = vst.msk [vmem:[%s217] sm:$0x3] %vm417, %v416
      %p419 = scmp.lt.s32.totalorder %s19, 1
      %s420 = scalar_select %p419, %s19, 1
      %p421 = scmp.lt.s32.totalorder %s20, 0
      %s422 = scalar_select %p421, %s20, 0
      %s423 = smul.addr %s420, 4
      %s424 = sadd.s32 %s422, %s423
      %s425 = smul.addr %s424, 8
      %s426 = scalar_lea.vmem %s2, %s425
      %p427 = scmp.lt.s32.totalorder %s19, 1
      %s428 = scalar_select %p427, %s19, 1
      %p429 = scmp.lt.s32.totalorder %s20, 0
      %s430 = scalar_select %p429, %s20, 0
      %s431 = sadd.s32 %s430, %s428
      %s432 = smul.addr %s431, 2
      %s433 = scalar_lea.vmem %s3, %s432
      // Predicated region
      $region29: #{temporal_mlp_forward.5} parent=27 // pred_check
        %p434 = pneg %p96
      $region30: #{temporal_mlp_forward.5} parent=27 // pred_check_branch
        %436 = sbr.rel (%p434) target = $region32
      $region31: #{temporal_mlp_forward.5} parent=27 // pred_region
        _
      $region32: #{temporal_mlp_forward.5} parent=27 // pred_fallthru
        _
      // Predicated region
      $region33: #{temporal_mlp_forward.5} parent=27 // pred_check
        %p437 = pneg %p124
      $region34: #{temporal_mlp_forward.5} parent=27 // pred_check_branch
        %439 = sbr.rel (%p437) target = $region36
      $region35: #{temporal_mlp_forward.5} parent=27 // pred_region
        _
      $region36: #{temporal_mlp_forward.5} parent=27 // pred_fallthru
        _
    $region28: #{temporal_mlp_forward.5} parent=5 // pred_fallthru
      _
    %p440 = scmp.le.s32.totalorder 2, %s10
    // Predicated region
    $region37: #{temporal_mlp_forward.5} parent=5 // pred_check
      %p441 = pneg %p440
    $region38: #{temporal_mlp_forward.5} parent=5 // pred_check_branch
      %443 = sbr.rel (%p441) target = $region40
    $region39: #{temporal_mlp_forward.5} parent=5 // pred_region
      %s444 = ssub.s32 %s10, 2
      // Predicated region
      $region41: #{temporal_mlp_forward.5} parent=39 // pred_check
        %p445 = pneg %p102
      $region42: #{temporal_mlp_forward.5} parent=39 // pred_check_branch
        %447 = sbr.rel (%p445) target = $region44
      $region43: #{temporal_mlp_forward.5} parent=39 // pred_region
        %p448 = scmp.lt.s32.totalorder %s21, 1
        %s449 = scalar_select %p448, %s21, 1
        %p450 = scmp.lt.s32.totalorder %s22, 0
        %s451 = scalar_select %p450, %s22, 0
        %s452 = smul.addr %s449, 4
        %s453 = sadd.s32 %s451, %s452
        %s454 = smul.addr %s453, 8
        %s455 = scalar_lea.vmem %s2, %s454
      $region44: #{temporal_mlp_forward.5} parent=39 // pred_fallthru
        _
      // Predicated region
      $region45: #{temporal_mlp_forward.5} parent=39 // pred_check
        %p456 = pneg %p130
      $region46: #{temporal_mlp_forward.5} parent=39 // pred_check_branch
        %458 = sbr.rel (%p456) target = $region48
      $region47: #{temporal_mlp_forward.5} parent=39 // pred_region
        %p459 = scmp.lt.s32.totalorder %s21, 1
        %s460 = scalar_select %p459, %s21, 1
        %p461 = scmp.lt.s32.totalorder %s22, 0
        %s462 = scalar_select %p461, %s22, 0
        %s463 = sadd.s32 %s462, %s460
        %s464 = smul.addr %s463, 2
        %s465 = scalar_lea.vmem %s3, %s464
      $region48: #{temporal_mlp_forward.5} parent=39 // pred_fallthru
        _
    $region40: #{temporal_mlp_forward.5} parent=5 // pred_fallthru
      _
  $region6: #{temporal_mlp_forward.5} parent=0 // loop_footer
    %s14 = sadd.s32 1, %s10
  $region7: #{temporal_mlp_forward.5} parent=0 // loop_footer_branch
    %9 = sbr.rel target = $region3
  $region8: #{temporal_mlp_forward.5} parent=0 // loop_exit
    _

// kernel: temporal_mlp_forward.6
$region0: #{temporal_mlp_forward.6}
  #allocation0 [shape = 'u32[]', space=smem, size = 0x4, offset = 0x4, fixed_abs, tag = 'smem constant byte address 0x4 - core index']
  #allocation1 [shape = 'u32[144,128]{1,0:T(1,128)}', space=vmem, size = 0x12000, scoped, tag = 'internal scratch']
  %s0 = inlined_call_operand.vmem [shape: f32[2,32,128], index: 0, kind: input, shape index: {}]
  %s1 = inlined_call_operand.vmem [shape: f32[32,1], index: 1, kind: input, shape index: {}]
  %s2 = inlined_call_operand.vmem [shape: f32[32,1], index: 2, kind: input, shape index: {}]
  %s3 = inlined_call_operand.vmem [shape: f32[64,32], index: 3, kind: input, shape index: {}]
  %s4 = inlined_call_operand.vmem [shape: f32[2,64,128], index: 4, kind: output, shape index: {0}]
  %s5 = inlined_call_operand.vmem [shape: f32[2,1,2,64], index: 5, kind: output, shape index: {1}]
  %6 = xla_tuple %s4, %s5
  %s7 = sld [smem:[#allocation0]]
  $region57: #{temporal_mlp_forward.6} parent=0
    _
  %s9 = ssub.s32 1, %s7
  %s10 = scalar_select 0, %s9, %s7
  loop: start=0, step=1, limit=4
  $region2: #{temporal_mlp_forward.6} parent=0 // loop_pre_header
    _
  $region3: #{temporal_mlp_forward.6} parent=0 // loop_header
    %s12 = sphi 0, %s16
    %p13 = scmp.ge.s32.totalorder %s12, 4
    %s19 = sphi 0, %s31
    %s20 = sphi 0, %s27
    %s21 = sphi 0, %s19
    %s22 = sphi 0, %s20
    %s23 = sphi 0, %s21
    %s24 = sphi 0, %s22
    %s36 = sphi 0, %s38
    %s39 = sphi 0, %s36
    %s40 = sphi 0, %s39
    %s56 = sphi 0, %s40
    %s60 = sphi 0, %s60
    %s62 = sphi 0, %s60
    %s63 = sphi 0, %s62
    %s77 = sphi 0, %s63
    %s81 = sphi 0, %s81
    %s83 = sphi 0, %s81
    %s84 = sphi 0, %s83
    %s98 = sphi 0, %s84
    %s102 = sphi 0, %s102
    %s104 = sphi 0, %s102
    %s105 = sphi 0, %s104
    %s119 = sphi 0, %s105
    %s127 = sphi 0, %s129
    %s130 = sphi 0, %s127
    %s131 = sphi 0, %s130
    %s147 = sphi 0, %s131
    %s155 = sphi 0, %s157
    %s158 = sphi 0, %s155
    %s159 = sphi 0, %s158
    %s175 = sphi 0, %s159
  $region4: #{temporal_mlp_forward.6} parent=0 // loop_header_branch
    %15 = sbr.rel (%p13) target = $region8
  $region5: #{temporal_mlp_forward.6} parent=0 // loop_body
    %s17 = ssub.s32 %s12, 1
    %s18 = ssub.s32 %s12, 2
    %s25 = sadd.s32 1, %s20
    %p26 = scmp.ge.s32.totalorder %s25, 1
    %s27 = scalar_select %p26, 0, %s25
    %s28 = sadd.s32 1, %s19
    %s29 = scalar_select %p26, %s28, %s19
    %p30 = scmp.ge.s32.totalorder %s29, 2
    %s31 = scalar_select %p30, 0, %s29
    %s32 = ssub.s32 %s19, %s31
    %s33 = ssub.s32 %s20, %s27
    %s34 = sor.u32 %s32, %s33
    %p35 = scmp.eq.s32.totalorder %s34, 0
    %s37 = sadd.s32 %s36, 1
    %s38 = scalar_select %p35, %s36, %s37
    %p41 = pneg %p35
    %p42 = scmp.eq.s32.totalorder %s12, 1
    %p43 = por %p41, %p42
    %p44 = scmp.ne.s32.totalorder %s36, %s39
    %p45 = scmp.eq.s32.totalorder %s12, 0
    %p46 = por %p44, %p45
    %p47 = scmp.ne.s32.totalorder %s36, %s39
    %p48 = scmp.eq.s32.totalorder %s17, 1
    %p49 = por %p47, %p48
    %p50 = scmp.ne.s32.totalorder %s39, %s40
    %p51 = scmp.eq.s32.totalorder %s17, 0
    %p52 = por %p50, %p51
    %p53 = scmp.ne.s32.totalorder %s39, %s40
    %p54 = scmp.eq.s32.totalorder %s18, 1
    %p55 = por %p53, %p54
    %p57 = scmp.ne.s32.totalorder %s40, %s56
    %p58 = scmp.eq.s32.totalorder %s18, 0
    %p59 = por %p57, %p58
    %s61 = sadd.s32 %s60, 1
    %p64 = scmp.eq.s32.totalorder %s12, 1
    %p65 = scmp.ne.s32.totalorder %s60, %s62
    %p66 = scmp.eq.s32.totalorder %s12, 0
    %p67 = por %p65, %p66
    %p68 = scmp.ne.s32.totalorder %s60, %s62
    %p69 = scmp.eq.s32.totalorder %s17, 1
    %p70 = por %p68, %p69
    %p71 = scmp.ne.s32.totalorder %s62, %s63
    %p72 = scmp.eq.s32.totalorder %s17, 0
    %p73 = por %p71, %p72
    %p74 = scmp.ne.s32.totalorder %s62, %s63
    %p75 = scmp.eq.s32.totalorder %s18, 1
    %p76 = por %p74, %p75
    %p78 = scmp.ne.s32.totalorder %s63, %s77
    %p79 = scmp.eq.s32.totalorder %s18, 0
    %p80 = por %p78, %p79
    %s82 = sadd.s32 %s81, 1
    %p85 = scmp.eq.s32.totalorder %s12, 1
    %p86 = scmp.ne.s32.totalorder %s81, %s83
    %p87 = scmp.eq.s32.totalorder %s12, 0
    %p88 = por %p86, %p87
    %p89 = scmp.ne.s32.totalorder %s81, %s83
    %p90 = scmp.eq.s32.totalorder %s17, 1
    %p91 = por %p89, %p90
    %p92 = scmp.ne.s32.totalorder %s83, %s84
    %p93 = scmp.eq.s32.totalorder %s17, 0
    %p94 = por %p92, %p93
    %p95 = scmp.ne.s32.totalorder %s83, %s84
    %p96 = scmp.eq.s32.totalorder %s18, 1
    %p97 = por %p95, %p96
    %p99 = scmp.ne.s32.totalorder %s84, %s98
    %p100 = scmp.eq.s32.totalorder %s18, 0
    %p101 = por %p99, %p100
    %s103 = sadd.s32 %s102, 1
    %p106 = scmp.eq.s32.totalorder %s12, 1
    %p107 = scmp.ne.s32.totalorder %s102, %s104
    %p108 = scmp.eq.s32.totalorder %s12, 0
    %p109 = por %p107, %p108
    %p110 = scmp.ne.s32.totalorder %s102, %s104
    %p111 = scmp.eq.s32.totalorder %s17, 1
    %p112 = por %p110, %p111
    %p113 = scmp.ne.s32.totalorder %s104, %s105
    %p114 = scmp.eq.s32.totalorder %s17, 0
    %p115 = por %p113, %p114
    %p116 = scmp.ne.s32.totalorder %s104, %s105
    %p117 = scmp.eq.s32.totalorder %s18, 1
    %p118 = por %p116, %p117
    %p120 = scmp.ne.s32.totalorder %s105, %s119
    %p121 = scmp.eq.s32.totalorder %s18, 0
    %p122 = por %p120, %p121
    %s123 = ssub.s32 %s19, %s31
    %s124 = ssub.s32 %s20, %s27
    %s125 = sor.u32 %s123, %s124
    %p126 = scmp.eq.s32.totalorder %s125, 0
    %s128 = sadd.s32 %s127, 1
    %s129 = scalar_select %p126, %s127, %s128
    %p132 = pneg %p126
    %p133 = scmp.eq.s32.totalorder %s12, 1
    %p134 = por %p132, %p133
    %p135 = scmp.ne.s32.totalorder %s127, %s130
    %p136 = scmp.eq.s32.totalorder %s12, 0
    %p137 = por %p135, %p136
    %p138 = scmp.ne.s32.totalorder %s127, %s130
    %p139 = scmp.eq.s32.totalorder %s17, 1
    %p140 = por %p138, %p139
    %p141 = scmp.ne.s32.totalorder %s130, %s131
    %p142 = scmp.eq.s32.totalorder %s17, 0
    %p143 = por %p141, %p142
    %p144 = scmp.ne.s32.totalorder %s130, %s131
    %p145 = scmp.eq.s32.totalorder %s18, 1
    %p146 = por %p144, %p145
    %p148 = scmp.ne.s32.totalorder %s131, %s147
    %p149 = scmp.eq.s32.totalorder %s18, 0
    %p150 = por %p148, %p149
    %s151 = ssub.s32 %s19, %s31
    %s152 = ssub.s32 %s20, %s27
    %s153 = sor.u32 %s151, %s152
    %p154 = scmp.eq.s32.totalorder %s153, 0
    %s156 = sadd.s32 %s155, 1
    %s157 = scalar_select %p154, %s155, %s156
    %p160 = pneg %p154
    %p161 = scmp.eq.s32.totalorder %s12, 1
    %p162 = por %p160, %p161
    %p163 = scmp.ne.s32.totalorder %s155, %s158
    %p164 = scmp.eq.s32.totalorder %s12, 0
    %p165 = por %p163, %p164
    %p166 = scmp.ne.s32.totalorder %s155, %s158
    %p167 = scmp.eq.s32.totalorder %s17, 1
    %p168 = por %p166, %p167
    %p169 = scmp.ne.s32.totalorder %s158, %s159
    %p170 = scmp.eq.s32.totalorder %s17, 0
    %p171 = por %p169, %p170
    %p172 = scmp.ne.s32.totalorder %s158, %s159
    %p173 = scmp.eq.s32.totalorder %s18, 1
    %p174 = por %p172, %p173
    %p176 = scmp.ne.s32.totalorder %s159, %s175
    %p177 = scmp.eq.s32.totalorder %s18, 0
    %p178 = por %p176, %p177
    %p179 = scmp.le.s32.totalorder 1, %s12
    %p180 = scmp.lt.s32.totalorder %s12, 3
    %p181 = pnand %p179, %p180
    %p182 = pneg %p181
    // Predicated region
    $region9: #{temporal_mlp_forward.6} parent=5 // pred_check
      _
    $region10: #{temporal_mlp_forward.6} parent=5 // pred_check_branch
      %184 = sbr.rel (%p181) target = $region12
    $region11: #{temporal_mlp_forward.6} parent=5 // pred_region
      %s185 = ssub.s32 %s12, 1
      // Predicated region
      $region13: #{temporal_mlp_forward.6} parent=11 // pred_check
        %p186 = pneg %p73
      $region14: #{temporal_mlp_forward.6} parent=11 // pred_check_branch
        %188 = sbr.rel (%p186) target = $region16
      $region15: #{temporal_mlp_forward.6} parent=11 // pred_region
        _
      $region16: #{temporal_mlp_forward.6} parent=11 // pred_fallthru
        _
      // Predicated region
      $region17: #{temporal_mlp_forward.6} parent=11 // pred_check
        %p189 = pneg %p94
      $region18: #{temporal_mlp_forward.6} parent=11 // pred_check_branch
        %191 = sbr.rel (%p189) target = $region20
      $region19: #{temporal_mlp_forward.6} parent=11 // pred_region
        _
      $region20: #{temporal_mlp_forward.6} parent=11 // pred_fallthru
        _
      // Predicated region
      $region21: #{temporal_mlp_forward.6} parent=11 // pred_check
        %p192 = pneg %p115
      $region22: #{temporal_mlp_forward.6} parent=11 // pred_check_branch
        %194 = sbr.rel (%p192) target = $region24
      $region23: #{temporal_mlp_forward.6} parent=11 // pred_region
        _
      $region24: #{temporal_mlp_forward.6} parent=11 // pred_fallthru
        _
    $region12: #{temporal_mlp_forward.6} parent=5 // pred_fallthru
      _
    %p195 = scmp.lt.s32.totalorder %s12, 2
    // Predicated region
    $region25: #{temporal_mlp_forward.6} parent=5 // pred_check
      %p196 = pneg %p195
    $region26: #{temporal_mlp_forward.6} parent=5 // pred_check_branch
      %198 = sbr.rel (%p196) target = $region28
    $region27: #{temporal_mlp_forward.6} parent=5 // pred_region
      // Predicated region
      $region29: #{temporal_mlp_forward.6} parent=27 // pred_check
        %p199 = pneg %p46
      $region30: #{temporal_mlp_forward.6} parent=27 // pred_check_branch
        %201 = sbr.rel (%p199) target = $region32
      $region31: #{temporal_mlp_forward.6} parent=27 // pred_region
        %p202 = scmp.lt.s32.totalorder %s19, 1
        %s203 = scalar_select %p202, %s19, 1
        %p204 = scmp.lt.s32.totalorder %s20, 0
        %s205 = scalar_select %p204, %s20, 0
        %s206 = smul.addr %s203, 4
        %s207 = sadd.s32 %s205, %s206
        %s208 = smul.addr %s207, 8
        %s209 = scalar_lea.vmem %s0, %s208
      $region32: #{temporal_mlp_forward.6} parent=27 // pred_fallthru
        _
    $region28: #{temporal_mlp_forward.6} parent=5 // pred_fallthru
      _
    %p210 = scmp.le.s32.totalorder 1, %s12
    %p211 = scmp.lt.s32.totalorder %s12, 3
    %p212 = pnand %p210, %p211
    %p213 = pneg %p212
    // Predicated region
    $region33: #{temporal_mlp_forward.6} parent=5 // pred_check
      _
    $region34: #{temporal_mlp_forward.6} parent=5 // pred_check_branch
      %215 = sbr.rel (%p212) target = $region36
    $region35: #{temporal_mlp_forward.6} parent=5 // pred_region
      %s216 = ssub.s32 %s12, 1
      %p217 = scmp.lt.s32.totalorder %s21, 1
      %s218 = scalar_select %p217, %s21, 1
      %p219 = scmp.lt.s32.totalorder %s22, 0
      %s220 = scalar_select %p219, %s22, 0
      %s221 = smul.addr %s218, 4
      %s222 = sadd.s32 %s220, %s221
      %s223 = smul.addr %s222, 8
      %s224 = scalar_lea.vmem %s0, %s223
      %p225 = pneg %p52
      %p226 = pneg %p49
      %p227 = pneg %p73
      %p228 = pneg %p70
      %p229 = pneg %p94
      %p230 = pneg %p91
      %p231 = pneg %p115
      %p232 = pneg %p112
      %p233 = pneg %p143
      %p234 = pneg %p140
      %p235 = scmp.lt.s32.totalorder %s21, 1
      %s236 = scalar_select %p235, %s21, 1
      %p237 = scmp.lt.s32.totalorder %s22, 0
      %s238 = scalar_select %p237, %s22, 0
      %s239 = smul.addr %s236, 8
      %s240 = sadd.s32 %s238, %s239
      %s241 = smul.addr %s240, 8
      %s242 = scalar_lea.vmem %s4, %s241
      %p243 = pneg %p171
      %p244 = pneg %p168
      %p245 = scmp.lt.s32.totalorder %s21, 1
      %s246 = scalar_select %p245, %s21, 1
      %p247 = scmp.lt.s32.totalorder %s22, 0
      %s248 = scalar_select %p247, %s22, 0
      %s249 = sadd.s32 %s248, %s246
      %s250 = smul.addr %s249, 2
      %s251 = scalar_lea.vmem %s5, %s250
      %p252 = scmp.lt.s32.totalorder %s21, 1
      %s253 = scalar_select %p252, %s21, 1
      %p254 = scmp.lt.s32.totalorder %s22, 0
      %s255 = scalar_select %p254, %s22, 0
      %s256 = smul.addr %s253, 4
      %s257 = sadd.s32 %s255, %s256
      %s258 = smul.addr %s257, 8
      %s259 = scalar_lea.vmem %s0, %s258
      %p260 = scmp.lt.s32.totalorder %s21, 1
      %s261 = scalar_select %p260, %s21, 1
      %p262 = scmp.lt.s32.totalorder %s22, 0
      %s263 = scalar_select %p262, %s22, 0
      %s264 = smul.addr %s261, 8
      %s265 = sadd.s32 %s263, %s264
      %s266 = smul.addr %s265, 8
      %s267 = scalar_lea.vmem %s4, %s266
      %p268 = scmp.lt.s32.totalorder %s21, 1
      %s269 = scalar_select %p268, %s21, 1
      %p270 = scmp.lt.s32.totalorder %s22, 0
      %s271 = scalar_select %p270, %s22, 0
      %s272 = sadd.s32 %s271, %s269
      %s273 = smul.addr %s272, 2
      %s274 = scalar_lea.vmem %s5, %s273
      %v275 = vld [vmem:[%s259] sm:$0xff]
      %v276 = vld [vmem:[%s259 + $0x8] sm:$0xff]
      %v277 = vld [vmem:[%s259 + $0x10] sm:$0xff]
      %v278 = vld [vmem:[%s259 + $0x18] sm:$0xff]
      %v279 = vld [vmem:[%s1] sm:$0xff]
      %v280 = vld [vmem:[%s1 + $0x8] sm:$0xff]
      %v281 = vld [vmem:[%s1 + $0x10] sm:$0xff]
      %v282 = vld [vmem:[%s1 + $0x18] sm:$0xff]
      %284 = vset.pattern.permute.xlu0 0
      %285 = vperm.xlu0 %284, %v279
      %v286 = vpop.permute.xlu0 %285
      %289 = vset.pattern.permute.xlu0 0
      %290 = vperm.xlu0 %289, %v280
      %v291 = vpop.permute.xlu0 %290
      %294 = vset.pattern.permute.xlu0 0
      %295 = vperm.xlu0 %294, %v281
      %v296 = vpop.permute.xlu0 %295
      %299 = vset.pattern.permute.xlu0 0
      %300 = vperm.xlu0 %299, %v282
      %v301 = vpop.permute.xlu0 %300
      %v303 = vmul.f32 %v275, %v286
      %v304 = vmul.f32 %v276, %v291
      %v305 = vmul.f32 %v277, %v296
      %v306 = vmul.f32 %v278, %v301
      %v307 = vld [vmem:[%s2] sm:$0xff]
      %v308 = vld [vmem:[%s2 + $0x8] sm:$0xff]
      %v309 = vld [vmem:[%s2 + $0x10] sm:$0xff]
      %v310 = vld [vmem:[%s2 + $0x18] sm:$0xff]
      %312 = vset.pattern.permute.xlu0 0
      %313 = vperm.xlu0 %312, %v307
      %v314 = vpop.permute.xlu0 %313
      %317 = vset.pattern.permute.xlu0 0
      %318 = vperm.xlu0 %317, %v308
      %v319 = vpop.permute.xlu0 %318
      %322 = vset.pattern.permute.xlu0 0
      %323 = vperm.xlu0 %322, %v309
      %v324 = vpop.permute.xlu0 %323
      %327 = vset.pattern.permute.xlu0 0
      %328 = vperm.xlu0 %327, %v310
      %v329 = vpop.permute.xlu0 %328
      %v331 = vadd.f32 %v303, %v314
      %v332 = vadd.f32 %v304, %v319
      %v333 = vadd.f32 %v305, %v324
      %v334 = vadd.f32 %v306, %v329
      %v335 = vmul.f32 %v331, 0.02
      %v336 = vmul.f32 %v332, 0.02
      %v337 = vmul.f32 %v333, 0.02
      %v338 = vmul.f32 %v334, 0.02
      %v339 = vmax.f32 %v331, %v335
      %v340 = vmax.f32 %v332, %v336
      %v341 = vmax.f32 %v333, %v337
      %v342 = vmax.f32 %v334, %v338
      %v343 = vld [vmem:[%s3] sm:$0xff]
      %v344 = vld [vmem:[%s3 + $0x8] sm:$0xff]
      %v345 = vld [vmem:[%s3 + $0x10] sm:$0xff]
      %v346 = vld [vmem:[%s3 + $0x18] sm:$0xff]
      %v347 = vld [vmem:[%s3 + $0x20] sm:$0xff]
      %v348 = vld [vmem:[%s3 + $0x28] sm:$0xff]
      %v349 = vld [vmem:[%s3 + $0x30] sm:$0xff]
      %v350 = vld [vmem:[%s3 + $0x38] sm:$0xff]
      %vm351 = vcmask 261120
      %v353 = vsel %vm351, %v343, 0
      %v356 = vsel %vm351, %v344, 0
      %v359 = vsel %vm351, %v345, 0
      %v362 = vsel %vm351, %v346, 0
      %v365 = vsel %vm351, %v347, 0
      %v368 = vsel %vm351, %v348, 0
      %v371 = vsel %vm351, %v349, 0
      %v374 = vsel %vm351, %v350, 0
      %376 = vmatprep.subr.mxu0 0.0
      %377 = vmatpush1.msra.mxu0 0.0
      %378 = vmatprep.subr.mxu0 0.0
      %379 = vmatpush1.msra.mxu0 0.0
      %380 = vmatprep.subr.mxu0 0.0
      %381 = vmatpush1.msra.mxu0 0.0
      %382 = vmatprep.subr.mxu0 0.0
      %383 = vmatpush1.msra.mxu0 0.0
      %384 = vmatprep.subr.mxu0 0.0
      %385 = vmatpush1.msra.mxu0 0.0
      %386 = vmatprep.subr.mxu0 0.0
      %387 = vmatpush1.msra.mxu0 0.0
      %388 = vmatprep.subr.mxu0 0.0
      %389 = vmatpush1.msra.mxu0 0.0
      %390 = vmatprep.subr.mxu0 0.0
      %391 = vmatpush1.msra.mxu0 0.0
      %392 = vmatprep.subr.mxu0 0.0
      %393 = vmatpush1.msra.mxu0 0.0
      %394 = vmatprep.subr.mxu0 0.0
      %395 = vmatpush1.msra.mxu0 0.0
      %396 = vmatprep.subr.mxu0 0.0
      %397 = vmatpush1.msra.mxu0 0.0
      %398 = vmatprep.subr.mxu0 0.0
      %399 = vmatpush1.msra.mxu0 0.0
      %400 = vmatprep.subr.mxu0 0.0
      %401 = vmatpush1.msra.mxu0 %v342
      %402 = vmatprep.subr.mxu0 0.0
      %403 = vmatpush1.msra.mxu0 %v341
      %404 = vmatprep.subr.mxu0 0.0
      %405 = vmatpush1.msra.mxu0 %v340
      %406 = vmatprep.subr.mxu0 0.0
      %407 = vmatpush1.msra.mxu0 %v339
      %408 = vmatprep.subr.mxu0 0.0
      %409 = vmatpush2.msra.mxu0 0.0
      %410 = vmatprep.subr.mxu0 0.0
      %411 = vmatpush2.msra.mxu0 0.0
      %412 = vmatprep.subr.mxu0 0.0
      %413 = vmatpush2.msra.mxu0 0.0
      %414 = vmatprep.subr.mxu0 0.0
      %415 = vmatpush2.msra.mxu0 0.0
      %416 = vmatprep.subr.mxu0 0.0
      %417 = vmatpush2.msra.mxu0 0.0
      %418 = vmatprep.subr.mxu0 0.0
      %419 = vmatpush2.msra.mxu0 0.0
      %420 = vmatprep.subr.mxu0 0.0
      %421 = vmatpush2.msra.mxu0 0.0
      %422 = vmatprep.subr.mxu0 0.0
      %423 = vmatpush2.msra.mxu0 0.0
      %424 = vmatprep.subr.mxu0 0.0
      %425 = vmatpush2.msra.mxu0 0.0
      %426 = vmatprep.subr.mxu0 0.0
      %427 = vmatpush2.msra.mxu0 0.0
      %428 = vmatprep.subr.mxu0 0.0
      %429 = vmatpush2.msra.mxu0 0.0
      %430 = vmatprep.subr.mxu0 0.0
      %431 = vmatpush2.msra.mxu0 0.0
      %432 = vmatprep.subr.mxu0 0.0
      %433 = vmatpush2.msra.mxu0 0.0
      %434 = vmatprep.subr.mxu0 0.0
      %435 = vmatpush2.msra.mxu0 0.0
      %436 = vmatprep.subr.mxu0 0.0
      %437 = vmatpush2.msra.mxu0 0.0
      %438 = vmatprep.subr.mxu0 0.0
      %439 = vmatpush2.msra.mxu0 0.0
      %440 = vmatprep.mubr.f32.mxu0 0.0
      %441 = vmatmul.mubr.f32.gmra.mxu0 %v353
      %v442 = vpop.f32.mrf.mxu0
      %v443 = vadd.f32 0.0, %v442
      %v444 = vpop.f32.mrf.mxu0
      %445 = vmatprep.mubr.f32.mxu0 0.0
      %446 = vmatmul.mubr.f32.gmra.mxu0 %v356
      %v447 = vpop.f32.mrf.mxu0
      %v448 = vadd.f32 0.0, %v447
      %v449 = vpop.f32.mrf.mxu0
      %450 = vmatprep.mubr.f32.mxu0 0.0
      %451 = vmatmul.mubr.f32.gmra.mxu0 %v359
      %v452 = vpop.f32.mrf.mxu0
      %v453 = vadd.f32 0.0, %v452
      %v454 = vpop.f32.mrf.mxu0
      %455 = vmatprep.mubr.f32.mxu0 0.0
      %456 = vmatmul.mubr.f32.gmra.mxu0 %v362
      %v457 = vpop.f32.mrf.mxu0
      %v458 = vadd.f32 0.0, %v457
      %v459 = vpop.f32.mrf.mxu0
      %460 = vmatprep.mubr.f32.mxu0 0.0
      %461 = vmatmul.mubr.f32.gmra.mxu0 %v365
      %v462 = vpop.f32.mrf.mxu0
      %v463 = vadd.f32 0.0, %v462
      %v464 = vpop.f32.mrf.mxu0
      %465 = vmatprep.mubr.f32.mxu0 0.0
      %466 = vmatmul.mubr.f32.gmra.mxu0 %v368
      %v467 = vpop.f32.mrf.mxu0
      %v468 = vadd.f32 0.0, %v467
      %v469 = vpop.f32.mrf.mxu0
      %470 = vmatprep.mubr.f32.mxu0 0.0
      %471 = vmatmul.mubr.f32.gmra.mxu0 %v371
      %v472 = vpop.f32.mrf.mxu0
      %v473 = vadd.f32 0.0, %v472
      %v474 = vpop.f32.mrf.mxu0
      %475 = vmatprep.mubr.f32.mxu0 0.0
      %476 = vmatmul.mubr.f32.gmra.mxu0 %v374
      %v477 = vpop.f32.mrf.mxu0
      %v478 = vadd.f32 0.0, %v477
      %v479 = vpop.f32.mrf.mxu0
      %480 = vdwg.mxu0
      %481 = vst [vmem:[%s267] sm:$0xff] %v443
      %482 = vst [vmem:[%s267 + $0x8] sm:$0xff] %v448
      %483 = vst [vmem:[%s267 + $0x10] sm:$0xff] %v453
      %484 = vst [vmem:[%s267 + $0x18] sm:$0xff] %v458
      %485 = vst [vmem:[%s267 + $0x20] sm:$0xff] %v463
      %486 = vst [vmem:[%s267 + $0x28] sm:$0xff] %v468
      %487 = vst [vmem:[%s267 + $0x30] sm:$0xff] %v473
      %488 = vst [vmem:[%s267 + $0x38] sm:$0xff] %v478
      %v489 = vlaneseq
      %v490 = vand.u32 %v489, 127
      %s491 = smul.u32 %s22, 128
      %v492 = vstv %s491
      %v493 = vadd.s32 %v492, %v490
      %vm494 = vcmp.lt.s32.totalorder %v493, 16
      %v495 = vsel %vm494, 1, 0
      %vm496 = vcmp.eq.s32.totalorder %v495, 1
      %v497 = vsel %vm496, %v443, 0.0
      %v498 = vsel %vm496, %v448, 0.0
      %v499 = vsel %vm496, %v453, 0.0
      %v500 = vsel %vm496, %v458, 0.0
      %v501 = vsel %vm496, %v463, 0.0
      %v502 = vsel %vm496, %v468, 0.0
      %v503 = vsel %vm496, %v473, 0.0
      %v504 = vsel %vm496, %v478, 0.0
      %505 = vadd.xlane.f32.xlu0 %v497
      %v506 = vpop.xlane.xlu0 %505
      %507 = vadd.xlane.f32.xlu0 %v498
      %v508 = vpop.xlane.xlu0 %507
      %509 = vadd.xlane.f32.xlu0 %v499
      %v510 = vpop.xlane.xlu0 %509
      %511 = vadd.xlane.f32.xlu0 %v500
      %v512 = vpop.xlane.xlu0 %511
      %513 = vadd.xlane.f32.xlu0 %v501
      %v514 = vpop.xlane.xlu0 %513
      %515 = vadd.xlane.f32.xlu0 %v502
      %v516 = vpop.xlane.xlu0 %515
      %517 = vadd.xlane.f32.xlu0 %v503
      %v518 = vpop.xlane.xlu0 %517
      %519 = vadd.xlane.f32.xlu0 %v504
      %v520 = vpop.xlane.xlu0 %519
      %v521 = vmul.f32 %v497, %v497
      %v522 = vmul.f32 %v498, %v498
      %v523 = vmul.f32 %v499, %v499
      %v524 = vmul.f32 %v500, %v500
      %v525 = vmul.f32 %v501, %v501
      %v526 = vmul.f32 %v502, %v502
      %v527 = vmul.f32 %v503, %v503
      %v528 = vmul.f32 %v504, %v504
      %529 = vadd.xlane.f32.xlu0 %v521
      %v530 = vpop.xlane.xlu0 %529
      %531 = vadd.xlane.f32.xlu0 %v522
      %v532 = vpop.xlane.xlu0 %531
      %533 = vadd.xlane.f32.xlu0 %v523
      %v534 = vpop.xlane.xlu0 %533
      %535 = vadd.xlane.f32.xlu0 %v524
      %v536 = vpop.xlane.xlu0 %535
      %537 = vadd.xlane.f32.xlu0 %v525
      %v538 = vpop.xlane.xlu0 %537
      %539 = vadd.xlane.f32.xlu0 %v526
      %v540 = vpop.xlane.xlu0 %539
      %541 = vadd.xlane.f32.xlu0 %v527
      %v542 = vpop.xlane.xlu0 %541
      %543 = vadd.xlane.f32.xlu0 %v528
      %v544 = vpop.xlane.xlu0 %543
      %v553 = vlaneseq
      %v554 = vshrl.u32 %v553, 7
      %v555 = vsub.s32 %v490, %v554
      %v556 = vrot.slane %v506, %v555
      %v557 = vadd.s32 %v490, 4294967288
      %v558 = vlaneseq
      %v559 = vshrl.u32 %v558, 7
      %v560 = vsub.s32 %v557, %v559
      %v561 = vrot.slane %v508, %v560
      %vm562 = vcmask 130112
      %v563 = vsel %vm562, %v561, %v556
      %v564 = vadd.s32 %v490, 4294967280
      %v565 = vlaneseq
      %v566 = vshrl.u32 %v565, 7
      %v567 = vsub.s32 %v564, %v566
      %v568 = vrot.slane %v510, %v567
      %vm569 = vcmask 195712
      %v570 = vsel %vm569, %v568, %v563
      %v571 = vadd.s32 %v490, 4294967272
      %v572 = vlaneseq
      %v573 = vshrl.u32 %v572, 7
      %v574 = vsub.s32 %v571, %v573
      %v575 = vrot.slane %v512, %v574
      %vm576 = vcmask 261312
      %v577 = vsel %vm576, %v575, %v570
      %v578 = vadd.s32 %v490, 4294967264
      %v579 = vlaneseq
      %v580 = vshrl.u32 %v579, 7
      %v581 = vsub.s32 %v578, %v580
      %v582 = vrot.slane %v514, %v581
      %vm583 = vcmask 326912
      %v584 = vsel %vm583, %v582, %v577
      %v585 = vadd.s32 %v490, 4294967256
      %v586 = vlaneseq
      %v587 = vshrl.u32 %v586, 7
      %v588 = vsub.s32 %v585, %v587
      %v589 = vrot.slane %v516, %v588
      %vm590 = vcmask 392512
      %v591 = vsel %vm590, %v589, %v584
      %v592 = vadd.s32 %v490, 4294967248
      %v593 = vlaneseq
      %v594 = vshrl.u32 %v593, 7
      %v595 = vsub.s32 %v592, %v594
      %v596 = vrot.slane %v518, %v595
      %vm597 = vcmask 458112
      %v598 = vsel %vm597, %v596, %v591
      %v599 = vadd.s32 %v490, 4294967240
      %v600 = vlaneseq
      %v601 = vshrl.u32 %v600, 7
      %v602 = vsub.s32 %v599, %v601
      %v603 = vrot.slane %v520, %v602
      %vm604 = vcmask 523712
      %v605 = vsel %vm604, %v603, %v598
      %v615 = vlaneseq
      %v616 = vshrl.u32 %v615, 7
      %v617 = vsub.s32 %v490, %v616
      %v618 = vrot.slane %v530, %v617
      %v619 = vlaneseq
      %v620 = vshrl.u32 %v619, 7
      %v621 = vsub.s32 %v557, %v620
      %v622 = vrot.slane %v532, %v621
      %v623 = vsel %vm562, %v622, %v618
      %v624 = vlaneseq
      %v625 = vshrl.u32 %v624, 7
      %v626 = vsub.s32 %v564, %v625
      %v627 = vrot.slane %v534, %v626
      %v628 = vsel %vm569, %v627, %v623
      %v629 = vlaneseq
      %v630 = vshrl.u32 %v629, 7
      %v631 = vsub.s32 %v571, %v630
      %v632 = vrot.slane %v536, %v631
      %v633 = vsel %vm576, %v632, %v628
      %v634 = vlaneseq
      %v635 = vshrl.u32 %v634, 7
      %v636 = vsub.s32 %v578, %v635
      %v637 = vrot.slane %v538, %v636
      %v638 = vsel %vm583, %v637, %v633
      %v639 = vlaneseq
      %v640 = vshrl.u32 %v639, 7
      %v641 = vsub.s32 %v585, %v640
      %v642 = vrot.slane %v540, %v641
      %v643 = vsel %vm590, %v642, %v638
      %v644 = vlaneseq
      %v645 = vshrl.u32 %v644, 7
      %v646 = vsub.s32 %v592, %v645
      %v647 = vrot.slane %v542, %v646
      %v648 = vsel %vm597, %v647, %v643
      %v649 = vlaneseq
      %v650 = vshrl.u32 %v649, 7
      %v651 = vsub.s32 %v599, %v650
      %v652 = vrot.slane %v544, %v651
      %v653 = vsel %vm604, %v652, %v648
      %vm655 = vcmask 1040384
      %v656 = vsel %vm655, %v605, %v653
      %vm657 = vcmask 517120
      %658 = vst.msk [vmem:[%s274] sm:$0x3] %vm657, %v656
      %p659 = scmp.lt.s32.totalorder %s21, 1
      %s660 = scalar_select %p659, %s21, 1
      %p661 = scmp.lt.s32.totalorder %s22, 0
      %s662 = scalar_select %p661, %s22, 0
      %s663 = smul.addr %s660, 8
      %s664 = sadd.s32 %s662, %s663
      %s665 = smul.addr %s664, 8
      %s666 = scalar_lea.vmem %s4, %s665
      %p667 = scmp.lt.s32.totalorder %s21, 1
      %s668 = scalar_select %p667, %s21, 1
      %p669 = scmp.lt.s32.totalorder %s22, 0
      %s670 = scalar_select %p669, %s22, 0
      %s671 = sadd.s32 %s670, %s668
      %s672 = smul.addr %s671, 2
      %s673 = scalar_lea.vmem %s5, %s672
      // Predicated region
      $region37: #{temporal_mlp_forward.6} parent=35 // pred_check
        %p674 = pneg %p140
      $region38: #{temporal_mlp_forward.6} parent=35 // pred_check_branch
        %676 = sbr.rel (%p674) target = $region40
      $region39: #{temporal_mlp_forward.6} parent=35 // pred_region
        _
      $region40: #{temporal_mlp_forward.6} parent=35 // pred_fallthru
        _
      // Predicated region
      $region41: #{temporal_mlp_forward.6} parent=35 // pred_check
        %p677 = pneg %p168
      $region42: #{temporal_mlp_forward.6} parent=35 // pred_check_branch
        %679 = sbr.rel (%p677) target = $region44
      $region43: #{temporal_mlp_forward.6} parent=35 // pred_region
        _
      $region44: #{temporal_mlp_forward.6} parent=35 // pred_fallthru
        _
    $region36: #{temporal_mlp_forward.6} parent=5 // pred_fallthru
      _
    %p680 = scmp.le.s32.totalorder 2, %s12
    // Predicated region
    $region45: #{temporal_mlp_forward.6} parent=5 // pred_check
      %p681 = pneg %p680
    $region46: #{temporal_mlp_forward.6} parent=5 // pred_check_branch
      %683 = sbr.rel (%p681) target = $region48
    $region47: #{temporal_mlp_forward.6} parent=5 // pred_region
      %s684 = ssub.s32 %s12, 2
      // Predicated region
      $region49: #{temporal_mlp_forward.6} parent=47 // pred_check
        %p685 = pneg %p146
      $region50: #{temporal_mlp_forward.6} parent=47 // pred_check_branch
        %687 = sbr.rel (%p685) target = $region52
      $region51: #{temporal_mlp_forward.6} parent=47 // pred_region
        %p688 = scmp.lt.s32.totalorder %s23, 1
        %s689 = scalar_select %p688, %s23, 1
        %p690 = scmp.lt.s32.totalorder %s24, 0
        %s691 = scalar_select %p690, %s24, 0
        %s692 = smul.addr %s689, 8
        %s693 = sadd.s32 %s691, %s692
        %s694 = smul.addr %s693, 8
        %s695 = scalar_lea.vmem %s4, %s694
      $region52: #{temporal_mlp_forward.6} parent=47 // pred_fallthru
        _
      // Predicated region
      $region53: #{temporal_mlp_forward.6} parent=47 // pred_check
        %p696 = pneg %p174
      $region54: #{temporal_mlp_forward.6} parent=47 // pred_check_branch
        %698 = sbr.rel (%p696) target = $region56
      $region55: #{temporal_mlp_forward.6} parent=47 // pred_region
        %p699 = scmp.lt.s32.totalorder %s23, 1
        %s700 = scalar_select %p699, %s23, 1
        %p701 = scmp.lt.s32.totalorder %s24, 0
        %s702 = scalar_select %p701, %s24, 0
        %s703 = sadd.s32 %s702, %s700
        %s704 = smul.addr %s703, 2
        %s705 = scalar_lea.vmem %s5, %s704
      $region56: #{temporal_mlp_forward.6} parent=47 // pred_fallthru
        _
    $region48: #{temporal_mlp_forward.6} parent=5 // pred_fallthru
      _
  $region6: #{temporal_mlp_forward.6} parent=0 // loop_footer
    %s16 = sadd.s32 1, %s12
  $region7: #{temporal_mlp_forward.6} parent=0 // loop_footer_branch
    %11 = sbr.rel target = $region3
  $region8: #{temporal_mlp_forward.6} parent=0 // loop_exit
    _

// kernel: temporal_mlp_forward.4
$region0: #{temporal_mlp_forward.4}
  #allocation0 [shape = 'u32[]', space=smem, size = 0x4, offset = 0x4, fixed_abs, tag = 'smem constant byte address 0x4 - core index']
  #allocation1 [shape = 'u32[144,128]{1,0:T(1,128)}', space=vmem, size = 0x12000, scoped, tag = 'internal scratch']
  %s0 = inlined_call_operand.vmem [shape: f32[2,8], index: 0, kind: input, shape index: {}]
  %s1 = inlined_call_operand.vmem [shape: f32[8,512], index: 1, kind: input, shape index: {}]
  %s2 = inlined_call_operand.vmem [shape: f32[1,512], index: 2, kind: input, shape index: {}]
  %s3 = inlined_call_operand.vmem [shape: f32[512,64], index: 3, kind: input, shape index: {}]
  %s4 = inlined_call_operand.vmem [shape: f32[1,64], index: 4, kind: input, shape index: {}]
  %s5 = inlined_call_operand.vmem [shape: f32[2,64], index: 5, kind: output, shape index: {}]
  %s6 = sld [smem:[#allocation0]]
  $region30: #{temporal_mlp_forward.4} parent=0
    _
  %s8 = ssub.s32 1, %s6
  %s9 = scalar_select 0, %s8, %s6
  // Predicated region
  $region2: #{temporal_mlp_forward.4} parent=0 // pred_check
    _
  $region3: #{temporal_mlp_forward.4} parent=0 // pred_check_branch
    %11 = sbr.rel (0) target = $region5
  $region4: #{temporal_mlp_forward.4} parent=0 // pred_region
    _
  $region5: #{temporal_mlp_forward.4} parent=0 // pred_fallthru
    _
  // Predicated region
  $region6: #{temporal_mlp_forward.4} parent=0 // pred_check
    _
  $region7: #{temporal_mlp_forward.4} parent=0 // pred_check_branch
    %13 = sbr.rel (0) target = $region9
  $region8: #{temporal_mlp_forward.4} parent=0 // pred_region
    _
  $region9: #{temporal_mlp_forward.4} parent=0 // pred_fallthru
    _
  // Predicated region
  $region10: #{temporal_mlp_forward.4} parent=0 // pred_check
    _
  $region11: #{temporal_mlp_forward.4} parent=0 // pred_check_branch
    %15 = sbr.rel (0) target = $region13
  $region12: #{temporal_mlp_forward.4} parent=0 // pred_region
    _
  $region13: #{temporal_mlp_forward.4} parent=0 // pred_fallthru
    _
  // Predicated region
  $region14: #{temporal_mlp_forward.4} parent=0 // pred_check
    _
  $region15: #{temporal_mlp_forward.4} parent=0 // pred_check_branch
    %17 = sbr.rel (0) target = $region17
  $region16: #{temporal_mlp_forward.4} parent=0 // pred_region
    _
  $region17: #{temporal_mlp_forward.4} parent=0 // pred_fallthru
    _
  // Predicated region
  $region18: #{temporal_mlp_forward.4} parent=0 // pred_check
    _
  $region19: #{temporal_mlp_forward.4} parent=0 // pred_check_branch
    %19 = sbr.rel (0) target = $region21
  $region20: #{temporal_mlp_forward.4} parent=0 // pred_region
    _
  $region21: #{temporal_mlp_forward.4} parent=0 // pred_fallthru
    _
  %v20 = vld [vmem:[%s0] sm:$0x3]
  %v21 = vld [vmem:[%s1] sm:$0xff]
  %v22 = vld [vmem:[%s1 + $0x8] sm:$0xff]
  %v23 = vld [vmem:[%s1 + $0x10] sm:$0xff]
  %v24 = vld [vmem:[%s1 + $0x18] sm:$0xff]
  %v25 = vld [vmem:[%s2] sm:$0xf]
  %v27 = vlaneseq
  %v28 = vshrl.u32 %v27, 7
  %v29 = vsub.s32 0, %v28
  %v30 = vrot.slane %v25, %v29
  %v31 = vlaneseq
  %v32 = vshrl.u32 %v31, 7
  %v33 = vsub.s32 1, %v32
  %v34 = vrot.slane %v25, %v33
  %v35 = vlaneseq
  %v36 = vshrl.u32 %v35, 7
  %v37 = vsub.s32 2, %v36
  %v38 = vrot.slane %v25, %v37
  %v39 = vlaneseq
  %v40 = vshrl.u32 %v39, 7
  %v41 = vsub.s32 3, %v40
  %v42 = vrot.slane %v25, %v41
  %vm47 = vcmask 64512
  %v49 = vsel %vm47, %v20, 0
  %51 = vmatprep.subr.mxu0 0.0
  %52 = vmatpush1.msra.mxu0 0.0
  %53 = vmatprep.subr.mxu0 0.0
  %54 = vmatpush1.msra.mxu0 0.0
  %55 = vmatprep.subr.mxu0 0.0
  %56 = vmatpush1.msra.mxu0 0.0
  %57 = vmatprep.subr.mxu0 0.0
  %58 = vmatpush1.msra.mxu0 0.0
  %59 = vmatprep.subr.mxu0 0.0
  %60 = vmatpush1.msra.mxu0 0.0
  %61 = vmatprep.subr.mxu0 0.0
  %62 = vmatpush1.msra.mxu0 0.0
  %63 = vmatprep.subr.mxu0 0.0
  %64 = vmatpush1.msra.mxu0 0.0
  %65 = vmatprep.subr.mxu0 0.0
  %66 = vmatpush1.msra.mxu0 0.0
  %67 = vmatprep.subr.mxu0 0.0
  %68 = vmatpush1.msra.mxu0 0.0
  %69 = vmatprep.subr.mxu0 0.0
  %70 = vmatpush1.msra.mxu0 0.0
  %71 = vmatprep.subr.mxu0 0.0
  %72 = vmatpush1.msra.mxu0 0.0
  %73 = vmatprep.subr.mxu0 0.0
  %74 = vmatpush1.msra.mxu0 0.0
  %75 = vmatprep.subr.mxu0 0.0
  %76 = vmatpush1.msra.mxu0 0.0
  %77 = vmatprep.subr.mxu0 0.0
  %78 = vmatpush1.msra.mxu0 0.0
  %79 = vmatprep.subr.mxu0 0.0
  %80 = vmatpush1.msra.mxu0 0.0
  %81 = vmatprep.subr.mxu0 %v22
  %82 = vmatpush1.msra.mxu0 %v21
  %83 = vmatprep.subr.mxu0 0.0
  %84 = vmatpush2.msra.mxu0 0.0
  %85 = vmatprep.subr.mxu0 0.0
  %86 = vmatpush2.msra.mxu0 0.0
  %87 = vmatprep.subr.mxu0 0.0
  %88 = vmatpush2.msra.mxu0 0.0
  %89 = vmatprep.subr.mxu0 0.0
  %90 = vmatpush2.msra.mxu0 0.0
  %91 = vmatprep.subr.mxu0 0.0
  %92 = vmatpush2.msra.mxu0 0.0
  %93 = vmatprep.subr.mxu0 0.0
  %94 = vmatpush2.msra.mxu0 0.0
  %95 = vmatprep.subr.mxu0 0.0
  %96 = vmatpush2.msra.mxu0 0.0
  %97 = vmatprep.subr.mxu0 0.0
  %98 = vmatpush2.msra.mxu0 0.0
  %99 = vmatprep.subr.mxu0 0.0
  %100 = vmatpush2.msra.mxu0 0.0
  %101 = vmatprep.subr.mxu0 0.0
  %102 = vmatpush2.msra.mxu0 0.0
  %103 = vmatprep.subr.mxu0 0.0
  %104 = vmatpush2.msra.mxu0 0.0
  %105 = vmatprep.subr.mxu0 0.0
  %106 = vmatpush2.msra.mxu0 0.0
  %107 = vmatprep.subr.mxu0 0.0
  %108 = vmatpush2.msra.mxu0 0.0
  %109 = vmatprep.subr.mxu0 0.0
  %110 = vmatpush2.msra.mxu0 0.0
  %111 = vmatprep.subr.mxu0 0.0
  %112 = vmatpush2.msra.mxu0 0.0
  %113 = vmatprep.subr.mxu0 0.0
  %114 = vmatpush2.msra.mxu0 0.0
  %115 = vmatprep.mubr.f32.mxu0 0.0
  %116 = vmatmul.mubr.f32.gmra.mxu0 %v49
  %v117 = vpop.f32.mrf.mxu0
  %v118 = vadd.f32 %v30, %v117
  %v119 = vpop.f32.mrf.mxu0
  %v120 = vadd.f32 %v34, %v119
  %121 = vdwg.mxu0
  %122 = vmatprep.subr.mxu0 0.0
  %123 = vmatpush1.msra.mxu0 0.0
  %124 = vmatprep.subr.mxu0 0.0
  %125 = vmatpush1.msra.mxu0 0.0
  %126 = vmatprep.subr.mxu0 0.0
  %127 = vmatpush1.msra.mxu0 0.0
  %128 = vmatprep.subr.mxu0 0.0
  %129 = vmatpush1.msra.mxu0 0.0
  %130 = vmatprep.subr.mxu0 0.0
  %131 = vmatpush1.msra.mxu0 0.0
  %132 = vmatprep.subr.mxu0 0.0
  %133 = vmatpush1.msra.mxu0 0.0
  %134 = vmatprep.subr.mxu0 0.0
  %135 = vmatpush1.msra.mxu0 0.0
  %136 = vmatprep.subr.mxu0 0.0
  %137 = vmatpush1.msra.mxu0 0.0
  %138 = vmatprep.subr.mxu0 0.0
  %139 = vmatpush1.msra.mxu0 0.0
  %140 = vmatprep.subr.mxu0 0.0
  %141 = vmatpush1.msra.mxu0 0.0
  %142 = vmatprep.subr.mxu0 0.0
  %143 = vmatpush1.msra.mxu0 0.0
  %144 = vmatprep.subr.mxu0 0.0
  %145 = vmatpush1.msra.mxu0 0.0
  %146 = vmatprep.subr.mxu0 0.0
  %147 = vmatpush1.msra.mxu0 0.0
  %148 = vmatprep.subr.mxu0 0.0
  %149 = vmatpush1.msra.mxu0 0.0
  %150 = vmatprep.subr.mxu0 0.0
  %151 = vmatpush1.msra.mxu0 0.0
  %152 = vmatprep.subr.mxu0 %v24
  %153 = vmatpush1.msra.mxu0 %v23
  %154 = vmatprep.subr.mxu0 0.0
  %155 = vmatpush2.msra.mxu0 0.0
  %156 = vmatprep.subr.mxu0 0.0
  %157 = vmatpush2.msra.mxu0 0.0
  %158 = vmatprep.subr.mxu0 0.0
  %159 = vmatpush2.msra.mxu0 0.0
  %160 = vmatprep.subr.mxu0 0.0
  %161 = vmatpush2.msra.mxu0 0.0
  %162 = vmatprep.subr.mxu0 0.0
  %163 = vmatpush2.msra.mxu0 0.0
  %164 = vmatprep.subr.mxu0 0.0
  %165 = vmatpush2.msra.mxu0 0.0
  %166 = vmatprep.subr.mxu0 0.0
  %167 = vmatpush2.msra.mxu0 0.0
  %168 = vmatprep.subr.mxu0 0.0
  %169 = vmatpush2.msra.mxu0 0.0
  %170 = vmatprep.subr.mxu0 0.0
  %171 = vmatpush2.msra.mxu0 0.0
  %172 = vmatprep.subr.mxu0 0.0
  %173 = vmatpush2.msra.mxu0 0.0
  %174 = vmatprep.subr.mxu0 0.0
  %175 = vmatpush2.msra.mxu0 0.0
  %176 = vmatprep.subr.mxu0 0.0
  %177 = vmatpush2.msra.mxu0 0.0
  %178 = vmatprep.subr.mxu0 0.0
  %179 = vmatpush2.msra.mxu0 0.0
  %180 = vmatprep.subr.mxu0 0.0
  %181 = vmatpush2.msra.mxu0 0.0
  %182 = vmatprep.subr.mxu0 0.0
  %183 = vmatpush2.msra.mxu0 0.0
  %184 = vmatprep.subr.mxu0 0.0
  %185 = vmatpush2.msra.mxu0 0.0
  %186 = vmatprep.mubr.f32.mxu0 0.0
  %187 = vmatmul.mubr.f32.gmra.mxu0 %v49
  %v188 = vpop.f32.mrf.mxu0
  %v189 = vadd.f32 %v38, %v188
  %v190 = vpop.f32.mrf.mxu0
  %v191 = vadd.f32 %v42, %v190
  %192 = vdwg.mxu0
  %v193 = vxor.u32 %v118, 2147483648
  %v194 = vxor.u32 %v120, 2147483648
  %v195 = vxor.u32 %v189, 2147483648
  %v196 = vxor.u32 %v191, 2147483648
  %v197 = vmul.f32 %v193, 1.442695
  %v198 = vpow.pop %v197
  %v199 = vmul.f32 %v194, 1.442695
  %v200 = vpow.pop %v199
  %v201 = vmul.f32 %v195, 1.442695
  %v202 = vpow.pop %v201
  %v203 = vmul.f32 %v196, 1.442695
  %v204 = vpow.pop %v203
  %v205 = vadd.f32 %v198, 1.0
  %v206 = vadd.f32 %v200, 1.0
  %v207 = vadd.f32 %v202, 1.0
  %v208 = vadd.f32 %v204, 1.0
  %v209 = vrcp.pop %v205
  %v210 = vmul.f32 1.0, %v209
  %v211 = vrcp.pop %v206
  %v212 = vmul.f32 1.0, %v211
  %v213 = vrcp.pop %v207
  %v214 = vmul.f32 1.0, %v213
  %v215 = vrcp.pop %v208
  %v216 = vmul.f32 1.0, %v215
  %v217 = vmul.f32 %v118, %v210
  %v218 = vmul.f32 %v120, %v212
  %v219 = vmul.f32 %v189, %v214
  %v220 = vmul.f32 %v191, %v216
  %v221 = vld [vmem:[%s3] sm:$0xff]
  %v222 = vld [vmem:[%s3 + $0x8] sm:$0xff]
  %v223 = vld [vmem:[%s3 + $0x10] sm:$0xff]
  %v224 = vld [vmem:[%s3 + $0x18] sm:$0xff]
  %v225 = vld [vmem:[%s3 + $0x20] sm:$0xff]
  %v226 = vld [vmem:[%s3 + $0x28] sm:$0xff]
  %v227 = vld [vmem:[%s3 + $0x30] sm:$0xff]
  %v228 = vld [vmem:[%s3 + $0x38] sm:$0xff]
  %v229 = vld [vmem:[%s3 + $0x40] sm:$0xff]
  %v230 = vld [vmem:[%s3 + $0x48] sm:$0xff]
  %v231 = vld [vmem:[%s3 + $0x50] sm:$0xff]
  %v232 = vld [vmem:[%s3 + $0x58] sm:$0xff]
  %v233 = vld [vmem:[%s3 + $0x60] sm:$0xff]
  %v234 = vld [vmem:[%s3 + $0x68] sm:$0xff]
  %v235 = vld [vmem:[%s3 + $0x70] sm:$0xff]
  %v236 = vld [vmem:[%s3 + $0x78] sm:$0xff]
  %v237 = vld [vmem:[%s3 + $0x80] sm:$0xff]
  %v238 = vld [vmem:[%s3 + $0x88] sm:$0xff]
  %v239 = vld [vmem:[%s3 + $0x90] sm:$0xff]
  %v240 = vld [vmem:[%s3 + $0x98] sm:$0xff]
  %v241 = vld [vmem:[%s3 + $0xa0] sm:$0xff]
  %v242 = vld [vmem:[%s3 + $0xa8] sm:$0xff]
  %v243 = vld [vmem:[%s3 + $0xb0] sm:$0xff]
  %v244 = vld [vmem:[%s3 + $0xb8] sm:$0xff]
  %v245 = vld [vmem:[%s3 + $0xc0] sm:$0xff]
  %v246 = vld [vmem:[%s3 + $0xc8] sm:$0xff]
  %v247 = vld [vmem:[%s3 + $0xd0] sm:$0xff]
  %v248 = vld [vmem:[%s3 + $0xd8] sm:$0xff]
  %v249 = vld [vmem:[%s3 + $0xe0] sm:$0xff]
  %v250 = vld [vmem:[%s3 + $0xe8] sm:$0xff]
  %v251 = vld [vmem:[%s3 + $0xf0] sm:$0xff]
  %v252 = vld [vmem:[%s3 + $0xf8] sm:$0xff]
  %v253 = vld [vmem:[%s3 + $0x100] sm:$0xff]
  %v254 = vld [vmem:[%s3 + $0x108] sm:$0xff]
  %v255 = vld [vmem:[%s3 + $0x110] sm:$0xff]
  %v256 = vld [vmem:[%s3 + $0x118] sm:$0xff]
  %v257 = vld [vmem:[%s3 + $0x120] sm:$0xff]
  %v258 = vld [vmem:[%s3 + $0x128] sm:$0xff]
  %v259 = vld [vmem:[%s3 + $0x130] sm:$0xff]
  %v260 = vld [vmem:[%s3 + $0x138] sm:$0xff]
  %v261 = vld [vmem:[%s3 + $0x140] sm:$0xff]
  %v262 = vld [vmem:[%s3 + $0x148] sm:$0xff]
  %v263 = vld [vmem:[%s3 + $0x150] sm:$0xff]
  %v264 = vld [vmem:[%s3 + $0x158] sm:$0xff]
  %v265 = vld [vmem:[%s3 + $0x160] sm:$0xff]
  %v266 = vld [vmem:[%s3 + $0x168] sm:$0xff]
  %v267 = vld [vmem:[%s3 + $0x170] sm:$0xff]
  %v268 = vld [vmem:[%s3 + $0x178] sm:$0xff]
  %v269 = vld [vmem:[%s3 + $0x180] sm:$0xff]
  %v270 = vld [vmem:[%s3 + $0x188] sm:$0xff]
  %v271 = vld [vmem:[%s3 + $0x190] sm:$0xff]
  %v272 = vld [vmem:[%s3 + $0x198] sm:$0xff]
  %v273 = vld [vmem:[%s3 + $0x1a0] sm:$0xff]
  %v274 = vld [vmem:[%s3 + $0x1a8] sm:$0xff]
  %v275 = vld [vmem:[%s3 + $0x1b0] sm:$0xff]
  %v276 = vld [vmem:[%s3 + $0x1b8] sm:$0xff]
  %v277 = vld [vmem:[%s3 + $0x1c0] sm:$0xff]
  %v278 = vld [vmem:[%s3 + $0x1c8] sm:$0xff]
  %v279 = vld [vmem:[%s3 + $0x1d0] sm:$0xff]
  %v280 = vld [vmem:[%s3 + $0x1d8] sm:$0xff]
  %v281 = vld [vmem:[%s3 + $0x1e0] sm:$0xff]
  %v282 = vld [vmem:[%s3 + $0x1e8] sm:$0xff]
  %v283 = vld [vmem:[%s3 + $0x1f0] sm:$0xff]
  %v284 = vld [vmem:[%s3 + $0x1f8] sm:$0xff]
  %v285 = vld [vmem:[%s4] sm:$0x1]
  %v287 = vlaneseq
  %v288 = vshrl.u32 %v287, 7
  %v289 = vsub.s32 0, %v288
  %v290 = vrot.slane %v285, %v289
  %292 = vmatprep.subr.mxu0 0.0
  %293 = vmatpush1.msra.mxu0 %v236
  %294 = vmatprep.subr.mxu0 0.0
  %295 = vmatpush1.msra.mxu0 %v235
  %296 = vmatprep.subr.mxu0 0.0
  %297 = vmatpush1.msra.mxu0 %v234
  %298 = vmatprep.subr.mxu0 0.0
  %299 = vmatpush1.msra.mxu0 %v233
  %300 = vmatprep.subr.mxu0 0.0
  %301 = vmatpush1.msra.mxu0 %v232
  %302 = vmatprep.subr.mxu0 0.0
  %303 = vmatpush1.msra.mxu0 %v231
  %304 = vmatprep.subr.mxu0 0.0
  %305 = vmatpush1.msra.mxu0 %v230
  %306 = vmatprep.subr.mxu0 0.0
  %307 = vmatpush1.msra.mxu0 %v229
  %308 = vmatprep.subr.mxu0 0.0
  %309 = vmatpush1.msra.mxu0 %v228
  %310 = vmatprep.subr.mxu0 0.0
  %311 = vmatpush1.msra.mxu0 %v227
  %312 = vmatprep.subr.mxu0 0.0
  %313 = vmatpush1.msra.mxu0 %v226
  %314 = vmatprep.subr.mxu0 0.0
  %315 = vmatpush1.msra.mxu0 %v225
  %316 = vmatprep.subr.mxu0 0.0
  %317 = vmatpush1.msra.mxu0 %v224
  %318 = vmatprep.subr.mxu0 0.0
  %319 = vmatpush1.msra.mxu0 %v223
  %320 = vmatprep.subr.mxu0 0.0
  %321 = vmatpush1.msra.mxu0 %v222
  %322 = vmatprep.subr.mxu0 0.0
  %323 = vmatpush1.msra.mxu0 %v221
  %324 = vmatprep.subr.mxu0 0.0
  %325 = vmatpush2.msra.mxu0 %v252
  %326 = vmatprep.subr.mxu0 0.0
  %327 = vmatpush2.msra.mxu0 %v251
  %328 = vmatprep.subr.mxu0 0.0
  %329 = vmatpush2.msra.mxu0 %v250
  %330 = vmatprep.subr.mxu0 0.0
  %331 = vmatpush2.msra.mxu0 %v249
  %332 = vmatprep.subr.mxu0 0.0
  %333 = vmatpush2.msra.mxu0 %v248
  %334 = vmatprep.subr.mxu0 0.0
  %335 = vmatpush2.msra.mxu0 %v247
  %336 = vmatprep.subr.mxu0 0.0
  %337 = vmatpush2.msra.mxu0 %v246
  %338 = vmatprep.subr.mxu0 0.0
  %339 = vmatpush2.msra.mxu0 %v245
  %340 = vmatprep.subr.mxu0 0.0
  %341 = vmatpush2.msra.mxu0 %v244
  %342 = vmatprep.subr.mxu0 0.0
  %343 = vmatpush2.msra.mxu0 %v243
  %344 = vmatprep.subr.mxu0 0.0
  %345 = vmatpush2.msra.mxu0 %v242
  %346 = vmatprep.subr.mxu0 0.0
  %347 = vmatpush2.msra.mxu0 %v241
  %348 = vmatprep.subr.mxu0 0.0
  %349 = vmatpush2.msra.mxu0 %v240
  %350 = vmatprep.subr.mxu0 0.0
  %351 = vmatpush2.msra.mxu0 %v239
  %352 = vmatprep.subr.mxu0 0.0
  %353 = vmatpush2.msra.mxu0 %v238
  %354 = vmatprep.subr.mxu0 0.0
  %355 = vmatpush2.msra.mxu0 %v237
  %356 = vmatprep.mubr.f32.mxu0 %v218
  %357 = vmatmul.mubr.f32.gmra.mxu0 %v217
  %v358 = vpop.f32.mrf.mxu0
  %v359 = vadd.f32 %v290, %v358
  %v360 = vpop.f32.mrf.mxu0
  %361 = vdwg.mxu0
  %362 = vmatprep.subr.mxu0 0.0
  %363 = vmatpush1.msra.mxu0 %v268
  %364 = vmatprep.subr.mxu0 0.0
  %365 = vmatpush1.msra.mxu0 %v267
  %366 = vmatprep.subr.mxu0 0.0
  %367 = vmatpush1.msra.mxu0 %v266
  %368 = vmatprep.subr.mxu0 0.0
  %369 = vmatpush1.msra.mxu0 %v265
  %370 = vmatprep.subr.mxu0 0.0
  %371 = vmatpush1.msra.mxu0 %v264
  %372 = vmatprep.subr.mxu0 0.0
  %373 = vmatpush1.msra.mxu0 %v263
  %374 = vmatprep.subr.mxu0 0.0
  %375 = vmatpush1.msra.mxu0 %v262
  %376 = vmatprep.subr.mxu0 0.0
  %377 = vmatpush1.msra.mxu0 %v261
  %378 = vmatprep.subr.mxu0 0.0
  %379 = vmatpush1.msra.mxu0 %v260
  %380 = vmatprep.subr.mxu0 0.0
  %381 = vmatpush1.msra.mxu0 %v259
  %382 = vmatprep.subr.mxu0 0.0
  %383 = vmatpush1.msra.mxu0 %v258
  %384 = vmatprep.subr.mxu0 0.0
  %385 = vmatpush1.msra.mxu0 %v257
  %386 = vmatprep.subr.mxu0 0.0
  %387 = vmatpush1.msra.mxu0 %v256
  %388 = vmatprep.subr.mxu0 0.0
  %389 = vmatpush1.msra.mxu0 %v255
  %390 = vmatprep.subr.mxu0 0.0
  %391 = vmatpush1.msra.mxu0 %v254
  %392 = vmatprep.subr.mxu0 0.0
  %393 = vmatpush1.msra.mxu0 %v253
  %394 = vmatprep.subr.mxu0 0.0
  %395 = vmatpush2.msra.mxu0 %v284
  %396 = vmatprep.subr.mxu0 0.0
  %397 = vmatpush2.msra.mxu0 %v283
  %398 = vmatprep.subr.mxu0 0.0
  %399 = vmatpush2.msra.mxu0 %v282
  %400 = vmatprep.subr.mxu0 0.0
  %401 = vmatpush2.msra.mxu0 %v281
  %402 = vmatprep.subr.mxu0 0.0
  %403 = vmatpush2.msra.mxu0 %v280
  %404 = vmatprep.subr.mxu0 0.0
  %405 = vmatpush2.msra.mxu0 %v279
  %406 = vmatprep.subr.mxu0 0.0
  %407 = vmatpush2.msra.mxu0 %v278
  %408 = vmatprep.subr.mxu0 0.0
  %409 = vmatpush2.msra.mxu0 %v277
  %410 = vmatprep.subr.mxu0 0.0
  %411 = vmatpush2.msra.mxu0 %v276
  %412 = vmatprep.subr.mxu0 0.0
  %413 = vmatpush2.msra.mxu0 %v275
  %414 = vmatprep.subr.mxu0 0.0
  %415 = vmatpush2.msra.mxu0 %v274
  %416 = vmatprep.subr.mxu0 0.0
  %417 = vmatpush2.msra.mxu0 %v273
  %418 = vmatprep.subr.mxu0 0.0
  %419 = vmatpush2.msra.mxu0 %v272
  %420 = vmatprep.subr.mxu0 0.0
  %421 = vmatpush2.msra.mxu0 %v271
  %422 = vmatprep.subr.mxu0 0.0
  %423 = vmatpush2.msra.mxu0 %v270
  %424 = vmatprep.subr.mxu0 0.0
  %425 = vmatpush2.msra.mxu0 %v269
  %426 = vmatprep.mubr.f32.mxu0 %v220
  %427 = vmatmul.mubr.f32.gmra.mxu0 %v219
  %v428 = vpop.f32.mrf.mxu0
  %v429 = vadd.f32 %v359, %v428
  %v430 = vpop.f32.mrf.mxu0
  %431 = vdwg.mxu0
  %vm432 = vcmask 517120
  %433 = vst.msk [vmem:[%s5] sm:$0x3] %vm432, %v429
  // Predicated region
  $region22: #{temporal_mlp_forward.4} parent=0 // pred_check
    _
  $region23: #{temporal_mlp_forward.4} parent=0 // pred_check_branch
    %435 = sbr.rel (0) target = $region25
  $region24: #{temporal_mlp_forward.4} parent=0 // pred_region
    _
  $region25: #{temporal_mlp_forward.4} parent=0 // pred_fallthru
    _
  // Predicated region
  $region26: #{temporal_mlp_forward.4} parent=0 // pred_check
    _
  $region27: #{temporal_mlp_forward.4} parent=0 // pred_check_branch
    %437 = sbr.rel (0) target = $region29
  $region28: #{temporal_mlp_forward.4} parent=0 // pred_region
    _
  $region29: #{temporal_mlp_forward.4} parent=0 // pred_fallthru
    _

// kernel: temporal_mlp_forward.7
$region0: #{temporal_mlp_forward.7}
  #allocation0 [shape = 'u32[]', space=smem, size = 0x4, offset = 0x4, fixed_abs, tag = 'smem constant byte address 0x4 - core index']
  #allocation1 [shape = 'u32[144,128]{1,0:T(1,128)}', space=vmem, size = 0x12000, scoped, tag = 'internal scratch']
  %s0 = inlined_call_operand.vmem [shape: f32[2,64,128], index: 0, kind: input, shape index: {}]
  %s1 = inlined_call_operand.vmem [shape: f32[64,1], index: 1, kind: input, shape index: {}]
  %s2 = inlined_call_operand.vmem [shape: f32[64,1], index: 2, kind: input, shape index: {}]
  %s3 = inlined_call_operand.vmem [shape: f32[2,64,1], index: 3, kind: input, shape index: {}]
  %s4 = inlined_call_operand.vmem [shape: f32[2,64,128], index: 4, kind: output, shape index: {}]
  %s5 = sld [smem:[#allocation0]]
  $region49: #{temporal_mlp_forward.7} parent=0
    _
  %s7 = ssub.s32 1, %s5
  %s8 = scalar_select 0, %s7, %s5
  loop: start=0, step=1, limit=4
  $region2: #{temporal_mlp_forward.7} parent=0 // loop_pre_header
    _
  $region3: #{temporal_mlp_forward.7} parent=0 // loop_header
    %s10 = sphi 0, %s14
    %p11 = scmp.ge.s32.totalorder %s10, 4
    %s17 = sphi 0, %s29
    %s18 = sphi 0, %s25
    %s19 = sphi 0, %s17
    %s20 = sphi 0, %s18
    %s21 = sphi 0, %s19
    %s22 = sphi 0, %s20
    %s34 = sphi 0, %s36
    %s37 = sphi 0, %s34
    %s38 = sphi 0, %s37
    %s54 = sphi 0, %s38
    %s58 = sphi 0, %s58
    %s60 = sphi 0, %s58
    %s61 = sphi 0, %s60
    %s75 = sphi 0, %s61
    %s79 = sphi 0, %s79
    %s81 = sphi 0, %s79
    %s82 = sphi 0, %s81
    %s96 = sphi 0, %s82
    %s102 = sphi 0, %s104
    %s105 = sphi 0, %s102
    %s106 = sphi 0, %s105
    %s122 = sphi 0, %s106
    %s130 = sphi 0, %s132
    %s133 = sphi 0, %s130
    %s134 = sphi 0, %s133
    %s150 = sphi 0, %s134
  $region4: #{temporal_mlp_forward.7} parent=0 // loop_header_branch
    %13 = sbr.rel (%p11) target = $region8
  $region5: #{temporal_mlp_forward.7} parent=0 // loop_body
    %s15 = ssub.s32 %s10, 1
    %s16 = ssub.s32 %s10, 2
    %s23 = sadd.s32 1, %s18
    %p24 = scmp.ge.s32.totalorder %s23, 1
    %s25 = scalar_select %p24, 0, %s23
    %s26 = sadd.s32 1, %s17
    %s27 = scalar_select %p24, %s26, %s17
    %p28 = scmp.ge.s32.totalorder %s27, 2
    %s29 = scalar_select %p28, 0, %s27
    %s30 = ssub.s32 %s17, %s29
    %s31 = ssub.s32 %s18, %s25
    %s32 = sor.u32 %s30, %s31
    %p33 = scmp.eq.s32.totalorder %s32, 0
    %s35 = sadd.s32 %s34, 1
    %s36 = scalar_select %p33, %s34, %s35
    %p39 = pneg %p33
    %p40 = scmp.eq.s32.totalorder %s10, 1
    %p41 = por %p39, %p40
    %p42 = scmp.ne.s32.totalorder %s34, %s37
    %p43 = scmp.eq.s32.totalorder %s10, 0
    %p44 = por %p42, %p43
    %p45 = scmp.ne.s32.totalorder %s34, %s37
    %p46 = scmp.eq.s32.totalorder %s15, 1
    %p47 = por %p45, %p46
    %p48 = scmp.ne.s32.totalorder %s37, %s38
    %p49 = scmp.eq.s32.totalorder %s15, 0
    %p50 = por %p48, %p49
    %p51 = scmp.ne.s32.totalorder %s37, %s38
    %p52 = scmp.eq.s32.totalorder %s16, 1
    %p53 = por %p51, %p52
    %p55 = scmp.ne.s32.totalorder %s38, %s54
    %p56 = scmp.eq.s32.totalorder %s16, 0
    %p57 = por %p55, %p56
    %s59 = sadd.s32 %s58, 1
    %p62 = scmp.eq.s32.totalorder %s10, 1
    %p63 = scmp.ne.s32.totalorder %s58, %s60
    %p64 = scmp.eq.s32.totalorder %s10, 0
    %p65 = por %p63, %p64
    %p66 = scmp.ne.s32.totalorder %s58, %s60
    %p67 = scmp.eq.s32.totalorder %s15, 1
    %p68 = por %p66, %p67
    %p69 = scmp.ne.s32.totalorder %s60, %s61
    %p70 = scmp.eq.s32.totalorder %s15, 0
    %p71 = por %p69, %p70
    %p72 = scmp.ne.s32.totalorder %s60, %s61
    %p73 = scmp.eq.s32.totalorder %s16, 1
    %p74 = por %p72, %p73
    %p76 = scmp.ne.s32.totalorder %s61, %s75
    %p77 = scmp.eq.s32.totalorder %s16, 0
    %p78 = por %p76, %p77
    %s80 = sadd.s32 %s79, 1
    %p83 = scmp.eq.s32.totalorder %s10, 1
    %p84 = scmp.ne.s32.totalorder %s79, %s81
    %p85 = scmp.eq.s32.totalorder %s10, 0
    %p86 = por %p84, %p85
    %p87 = scmp.ne.s32.totalorder %s79, %s81
    %p88 = scmp.eq.s32.totalorder %s15, 1
    %p89 = por %p87, %p88
    %p90 = scmp.ne.s32.totalorder %s81, %s82
    %p91 = scmp.eq.s32.totalorder %s15, 0
    %p92 = por %p90, %p91
    %p93 = scmp.ne.s32.totalorder %s81, %s82
    %p94 = scmp.eq.s32.totalorder %s16, 1
    %p95 = por %p93, %p94
    %p97 = scmp.ne.s32.totalorder %s82, %s96
    %p98 = scmp.eq.s32.totalorder %s16, 0
    %p99 = por %p97, %p98
    %s100 = ssub.s32 %s17, %s29
    %p101 = scmp.eq.s32.totalorder %s100, 0
    %s103 = sadd.s32 %s102, 1
    %s104 = scalar_select %p101, %s102, %s103
    %p107 = pneg %p101
    %p108 = scmp.eq.s32.totalorder %s10, 1
    %p109 = por %p107, %p108
    %p110 = scmp.ne.s32.totalorder %s102, %s105
    %p111 = scmp.eq.s32.totalorder %s10, 0
    %p112 = por %p110, %p111
    %p113 = scmp.ne.s32.totalorder %s102, %s105
    %p114 = scmp.eq.s32.totalorder %s15, 1
    %p115 = por %p113, %p114
    %p116 = scmp.ne.s32.totalorder %s105, %s106
    %p117 = scmp.eq.s32.totalorder %s15, 0
    %p118 = por %p116, %p117
    %p119 = scmp.ne.s32.totalorder %s105, %s106
    %p120 = scmp.eq.s32.totalorder %s16, 1
    %p121 = por %p119, %p120
    %p123 = scmp.ne.s32.totalorder %s106, %s122
    %p124 = scmp.eq.s32.totalorder %s16, 0
    %p125 = por %p123, %p124
    %s126 = ssub.s32 %s17, %s29
    %s127 = ssub.s32 %s18, %s25
    %s128 = sor.u32 %s126, %s127
    %p129 = scmp.eq.s32.totalorder %s128, 0
    %s131 = sadd.s32 %s130, 1
    %s132 = scalar_select %p129, %s130, %s131
    %p135 = pneg %p129
    %p136 = scmp.eq.s32.totalorder %s10, 1
    %p137 = por %p135, %p136
    %p138 = scmp.ne.s32.totalorder %s130, %s133
    %p139 = scmp.eq.s32.totalorder %s10, 0
    %p140 = por %p138, %p139
    %p141 = scmp.ne.s32.totalorder %s130, %s133
    %p142 = scmp.eq.s32.totalorder %s15, 1
    %p143 = por %p141, %p142
    %p144 = scmp.ne.s32.totalorder %s133, %s134
    %p145 = scmp.eq.s32.totalorder %s15, 0
    %p146 = por %p144, %p145
    %p147 = scmp.ne.s32.totalorder %s133, %s134
    %p148 = scmp.eq.s32.totalorder %s16, 1
    %p149 = por %p147, %p148
    %p151 = scmp.ne.s32.totalorder %s134, %s150
    %p152 = scmp.eq.s32.totalorder %s16, 0
    %p153 = por %p151, %p152
    %p154 = scmp.le.s32.totalorder 1, %s10
    %p155 = scmp.lt.s32.totalorder %s10, 3
    %p156 = pnand %p154, %p155
    %p157 = pneg %p156
    // Predicated region
    $region9: #{temporal_mlp_forward.7} parent=5 // pred_check
      _
    $region10: #{temporal_mlp_forward.7} parent=5 // pred_check_branch
      %159 = sbr.rel (%p156) target = $region12
    $region11: #{temporal_mlp_forward.7} parent=5 // pred_region
      %s160 = ssub.s32 %s10, 1
      // Predicated region
      $region13: #{temporal_mlp_forward.7} parent=11 // pred_check
        %p161 = pneg %p71
      $region14: #{temporal_mlp_forward.7} parent=11 // pred_check_branch
        %163 = sbr.rel (%p161) target = $region16
      $region15: #{temporal_mlp_forward.7} parent=11 // pred_region
        _
      $region16: #{temporal_mlp_forward.7} parent=11 // pred_fallthru
        _
      // Predicated region
      $region17: #{temporal_mlp_forward.7} parent=11 // pred_check
        %p164 = pneg %p92
      $region18: #{temporal_mlp_forward.7} parent=11 // pred_check_branch
        %166 = sbr.rel (%p164) target = $region20
      $region19: #{temporal_mlp_forward.7} parent=11 // pred_region
        _
      $region20: #{temporal_mlp_forward.7} parent=11 // pred_fallthru
        _
    $region12: #{temporal_mlp_forward.7} parent=5 // pred_fallthru
      _
    %p167 = scmp.lt.s32.totalorder %s10, 2
    // Predicated region
    $region21: #{temporal_mlp_forward.7} parent=5 // pred_check
      %p168 = pneg %p167
    $region22: #{temporal_mlp_forward.7} parent=5 // pred_check_branch
      %170 = sbr.rel (%p168) target = $region24
    $region23: #{temporal_mlp_forward.7} parent=5 // pred_region
      // Predicated region
      $region25: #{temporal_mlp_forward.7} parent=23 // pred_check
        %p171 = pneg %p44
      $region26: #{temporal_mlp_forward.7} parent=23 // pred_check_branch
        %173 = sbr.rel (%p171) target = $region28
      $region27: #{temporal_mlp_forward.7} parent=23 // pred_region
        %p174 = scmp.lt.s32.totalorder %s17, 1
        %s175 = scalar_select %p174, %s17, 1
        %p176 = scmp.lt.s32.totalorder %s18, 0
        %s177 = scalar_select %p176, %s18, 0
        %s178 = smul.addr %s175, 8
        %s179 = sadd.s32 %s177, %s178
        %s180 = smul.addr %s179, 8
        %s181 = scalar_lea.vmem %s0, %s180
      $region28: #{temporal_mlp_forward.7} parent=23 // pred_fallthru
        _
      // Predicated region
      $region29: #{temporal_mlp_forward.7} parent=23 // pred_check
        %p182 = pneg %p112
      $region30: #{temporal_mlp_forward.7} parent=23 // pred_check_branch
        %184 = sbr.rel (%p182) target = $region32
      $region31: #{temporal_mlp_forward.7} parent=23 // pred_region
        %p185 = scmp.lt.s32.totalorder %s17, 1
        %s186 = scalar_select %p185, %s17, 1
        %s187 = smul.addr %s186, 8
        %s188 = smul.addr %s187, 8
        %s189 = scalar_lea.vmem %s3, %s188
      $region32: #{temporal_mlp_forward.7} parent=23 // pred_fallthru
        _
    $region24: #{temporal_mlp_forward.7} parent=5 // pred_fallthru
      _
    %p190 = scmp.le.s32.totalorder 1, %s10
    %p191 = scmp.lt.s32.totalorder %s10, 3
    %p192 = pnand %p190, %p191
    %p193 = pneg %p192
    // Predicated region
    $region33: #{temporal_mlp_forward.7} parent=5 // pred_check
      _
    $region34: #{temporal_mlp_forward.7} parent=5 // pred_check_branch
      %195 = sbr.rel (%p192) target = $region36
    $region35: #{temporal_mlp_forward.7} parent=5 // pred_region
      %s196 = ssub.s32 %s10, 1
      %p197 = scmp.lt.s32.totalorder %s19, 1
      %s198 = scalar_select %p197, %s19, 1
      %p199 = scmp.lt.s32.totalorder %s20, 0
      %s200 = scalar_select %p199, %s20, 0
      %s201 = smul.addr %s198, 8
      %s202 = sadd.s32 %s200, %s201
      %s203 = smul.addr %s202, 8
      %s204 = scalar_lea.vmem %s0, %s203
      %p205 = pneg %p50
      %p206 = pneg %p47
      %p207 = pneg %p71
      %p208 = pneg %p68
      %p209 = pneg %p92
      %p210 = pneg %p89
      %p211 = scmp.lt.s32.totalorder %s19, 1
      %s212 = scalar_select %p211, %s19, 1
      %s213 = smul.addr %s212, 8
      %s214 = smul.addr %s213, 8
      %s215 = scalar_lea.vmem %s3, %s214
      %p216 = pneg %p118
      %p217 = pneg %p115
      %p218 = pneg %p146
      %p219 = pneg %p143
      %p220 = scmp.lt.s32.totalorder %s19, 1
      %s221 = scalar_select %p220, %s19, 1
      %p222 = scmp.lt.s32.totalorder %s20, 0
      %s223 = scalar_select %p222, %s20, 0
      %s224 = smul.addr %s221, 8
      %s225 = sadd.s32 %s223, %s224
      %s226 = smul.addr %s225, 8
      %s227 = scalar_lea.vmem %s4, %s226
      %p228 = scmp.lt.s32.totalorder %s19, 1
      %s229 = scalar_select %p228, %s19, 1
      %p230 = scmp.lt.s32.totalorder %s20, 0
      %s231 = scalar_select %p230, %s20, 0
      %s232 = smul.addr %s229, 8
      %s233 = sadd.s32 %s231, %s232
      %s234 = smul.addr %s233, 8
      %s235 = scalar_lea.vmem %s0, %s234
      %p236 = scmp.lt.s32.totalorder %s19, 1
      %s237 = scalar_select %p236, %s19, 1
      %s238 = smul.addr %s237, 8
      %s239 = smul.addr %s238, 8
      %s240 = scalar_lea.vmem %s3, %s239
      %p241 = scmp.lt.s32.totalorder %s19, 1
      %s242 = scalar_select %p241, %s19, 1
      %p243 = scmp.lt.s32.totalorder %s20, 0
      %s244 = scalar_select %p243, %s20, 0
      %s245 = smul.addr %s242, 8
      %s246 = sadd.s32 %s244, %s245
      %s247 = smul.addr %s246, 8
      %s248 = scalar_lea.vmem %s4, %s247
      %v249 = vld [vmem:[%s235] sm:$0xff]
      %v250 = vld [vmem:[%s235 + $0x8] sm:$0xff]
      %v251 = vld [vmem:[%s235 + $0x10] sm:$0xff]
      %v252 = vld [vmem:[%s235 + $0x18] sm:$0xff]
      %v253 = vld [vmem:[%s235 + $0x20] sm:$0xff]
      %v254 = vld [vmem:[%s235 + $0x28] sm:$0xff]
      %v255 = vld [vmem:[%s235 + $0x30] sm:$0xff]
      %v256 = vld [vmem:[%s235 + $0x38] sm:$0xff]
      %v257 = vld [vmem:[%s1] sm:$0xff]
      %v258 = vld [vmem:[%s1 + $0x8] sm:$0xff]
      %v259 = vld [vmem:[%s1 + $0x10] sm:$0xff]
      %v260 = vld [vmem:[%s1 + $0x18] sm:$0xff]
      %v261 = vld [vmem:[%s1 + $0x20] sm:$0xff]
      %v262 = vld [vmem:[%s1 + $0x28] sm:$0xff]
      %v263 = vld [vmem:[%s1 + $0x30] sm:$0xff]
      %v264 = vld [vmem:[%s1 + $0x38] sm:$0xff]
      %266 = vset.pattern.permute.xlu0 0
      %267 = vperm.xlu0 %266, %v257
      %v268 = vpop.permute.xlu0 %267
      %271 = vset.pattern.permute.xlu0 0
      %272 = vperm.xlu0 %271, %v258
      %v273 = vpop.permute.xlu0 %272
      %276 = vset.pattern.permute.xlu0 0
      %277 = vperm.xlu0 %276, %v259
      %v278 = vpop.permute.xlu0 %277
      %281 = vset.pattern.permute.xlu0 0
      %282 = vperm.xlu0 %281, %v260
      %v283 = vpop.permute.xlu0 %282
      %286 = vset.pattern.permute.xlu0 0
      %287 = vperm.xlu0 %286, %v261
      %v288 = vpop.permute.xlu0 %287
      %291 = vset.pattern.permute.xlu0 0
      %292 = vperm.xlu0 %291, %v262
      %v293 = vpop.permute.xlu0 %292
      %296 = vset.pattern.permute.xlu0 0
      %297 = vperm.xlu0 %296, %v263
      %v298 = vpop.permute.xlu0 %297
      %301 = vset.pattern.permute.xlu0 0
      %302 = vperm.xlu0 %301, %v264
      %v303 = vpop.permute.xlu0 %302
      %v305 = vmul.f32 %v249, %v268
      %v306 = vmul.f32 %v250, %v273
      %v307 = vmul.f32 %v251, %v278
      %v308 = vmul.f32 %v252, %v283
      %v309 = vmul.f32 %v253, %v288
      %v310 = vmul.f32 %v254, %v293
      %v311 = vmul.f32 %v255, %v298
      %v312 = vmul.f32 %v256, %v303
      %v313 = vld [vmem:[%s2] sm:$0xff]
      %v314 = vld [vmem:[%s2 + $0x8] sm:$0xff]
      %v315 = vld [vmem:[%s2 + $0x10] sm:$0xff]
      %v316 = vld [vmem:[%s2 + $0x18] sm:$0xff]
      %v317 = vld [vmem:[%s2 + $0x20] sm:$0xff]
      %v318 = vld [vmem:[%s2 + $0x28] sm:$0xff]
      %v319 = vld [vmem:[%s2 + $0x30] sm:$0xff]
      %v320 = vld [vmem:[%s2 + $0x38] sm:$0xff]
      %322 = vset.pattern.permute.xlu0 0
      %323 = vperm.xlu0 %322, %v313
      %v324 = vpop.permute.xlu0 %323
      %327 = vset.pattern.permute.xlu0 0
      %328 = vperm.xlu0 %327, %v314
      %v329 = vpop.permute.xlu0 %328
      %332 = vset.pattern.permute.xlu0 0
      %333 = vperm.xlu0 %332, %v315
      %v334 = vpop.permute.xlu0 %333
      %337 = vset.pattern.permute.xlu0 0
      %338 = vperm.xlu0 %337, %v316
      %v339 = vpop.permute.xlu0 %338
      %342 = vset.pattern.permute.xlu0 0
      %343 = vperm.xlu0 %342, %v317
      %v344 = vpop.permute.xlu0 %343
      %347 = vset.pattern.permute.xlu0 0
      %348 = vperm.xlu0 %347, %v318
      %v349 = vpop.permute.xlu0 %348
      %352 = vset.pattern.permute.xlu0 0
      %353 = vperm.xlu0 %352, %v319
      %v354 = vpop.permute.xlu0 %353
      %357 = vset.pattern.permute.xlu0 0
      %358 = vperm.xlu0 %357, %v320
      %v359 = vpop.permute.xlu0 %358
      %v361 = vadd.f32 %v305, %v324
      %v362 = vadd.f32 %v306, %v329
      %v363 = vadd.f32 %v307, %v334
      %v364 = vadd.f32 %v308, %v339
      %v365 = vadd.f32 %v309, %v344
      %v366 = vadd.f32 %v310, %v349
      %v367 = vadd.f32 %v311, %v354
      %v368 = vadd.f32 %v312, %v359
      %v369 = vld [vmem:[%s240] sm:$0xff]
      %v370 = vld [vmem:[%s240 + $0x8] sm:$0xff]
      %v371 = vld [vmem:[%s240 + $0x10] sm:$0xff]
      %v372 = vld [vmem:[%s240 + $0x18] sm:$0xff]
      %v373 = vld [vmem:[%s240 + $0x20] sm:$0xff]
      %v374 = vld [vmem:[%s240 + $0x28] sm:$0xff]
      %v375 = vld [vmem:[%s240 + $0x30] sm:$0xff]
      %v376 = vld [vmem:[%s240 + $0x38] sm:$0xff]
      %378 = vset.pattern.permute.xlu0 0
      %379 = vperm.xlu0 %378, %v369
      %v380 = vpop.permute.xlu0 %379
      %383 = vset.pattern.permute.xlu0 0
      %384 = vperm.xlu0 %383, %v370
      %v385 = vpop.permute.xlu0 %384
      %388 = vset.pattern.permute.xlu0 0
      %389 = vperm.xlu0 %388, %v371
      %v390 = vpop.permute.xlu0 %389
      %393 = vset.pattern.permute.xlu0 0
      %394 = vperm.xlu0 %393, %v372
      %v395 = vpop.permute.xlu0 %394
      %398 = vset.pattern.permute.xlu0 0
      %399 = vperm.xlu0 %398, %v373
      %v400 = vpop.permute.xlu0 %399
      %403 = vset.pattern.permute.xlu0 0
      %404 = vperm.xlu0 %403, %v374
      %v405 = vpop.permute.xlu0 %404
      %408 = vset.pattern.permute.xlu0 0
      %409 = vperm.xlu0 %408, %v375
      %v410 = vpop.permute.xlu0 %409
      %413 = vset.pattern.permute.xlu0 0
      %414 = vperm.xlu0 %413, %v376
      %v415 = vpop.permute.xlu0 %414
      %v417 = vadd.f32 %v361, %v380
      %v418 = vadd.f32 %v362, %v385
      %v419 = vadd.f32 %v363, %v390
      %v420 = vadd.f32 %v364, %v395
      %v421 = vadd.f32 %v365, %v400
      %v422 = vadd.f32 %v366, %v405
      %v423 = vadd.f32 %v367, %v410
      %v424 = vadd.f32 %v368, %v415
      %425 = vst [vmem:[%s248] sm:$0xff] %v417
      %426 = vst [vmem:[%s248 + $0x8] sm:$0xff] %v418
      %427 = vst [vmem:[%s248 + $0x10] sm:$0xff] %v419
      %428 = vst [vmem:[%s248 + $0x18] sm:$0xff] %v420
      %429 = vst [vmem:[%s248 + $0x20] sm:$0xff] %v421
      %430 = vst [vmem:[%s248 + $0x28] sm:$0xff] %v422
      %431 = vst [vmem:[%s248 + $0x30] sm:$0xff] %v423
      %432 = vst [vmem:[%s248 + $0x38] sm:$0xff] %v424
      %p433 = scmp.lt.s32.totalorder %s19, 1
      %s434 = scalar_select %p433, %s19, 1
      %p435 = scmp.lt.s32.totalorder %s20, 0
      %s436 = scalar_select %p435, %s20, 0
      %s437 = smul.addr %s434, 8
      %s438 = sadd.s32 %s436, %s437
      %s439 = smul.addr %s438, 8
      %s440 = scalar_lea.vmem %s4, %s439
      // Predicated region
      $region37: #{temporal_mlp_forward.7} parent=35 // pred_check
        %p441 = pneg %p143
      $region38: #{temporal_mlp_forward.7} parent=35 // pred_check_branch
        %443 = sbr.rel (%p441) target = $region40
      $region39: #{temporal_mlp_forward.7} parent=35 // pred_region
        _
      $region40: #{temporal_mlp_forward.7} parent=35 // pred_fallthru
        _
    $region36: #{temporal_mlp_forward.7} parent=5 // pred_fallthru
      _
    %p444 = scmp.le.s32.totalorder 2, %s10
    // Predicated region
    $region41: #{temporal_mlp_forward.7} parent=5 // pred_check
      %p445 = pneg %p444
    $region42: #{temporal_mlp_forward.7} parent=5 // pred_check_branch
      %447 = sbr.rel (%p445) target = $region44
    $region43: #{temporal_mlp_forward.7} parent=5 // pred_region
      %s448 = ssub.s32 %s10, 2
      // Predicated region
      $region45: #{temporal_mlp_forward.7} parent=43 // pred_check
        %p449 = pneg %p149
      $region46: #{temporal_mlp_forward.7} parent=43 // pred_check_branch
        %451 = sbr.rel (%p449) target = $region48
      $region47: #{temporal_mlp_forward.7} parent=43 // pred_region
        %p452 = scmp.lt.s32.totalorder %s21, 1
        %s453 = scalar_select %p452, %s21, 1
        %p454 = scmp.lt.s32.totalorder %s22, 0
        %s455 = scalar_select %p454, %s22, 0
        %s456 = smul.addr %s453, 8
        %s457 = sadd.s32 %s455, %s456
        %s458 = smul.addr %s457, 8
        %s459 = scalar_lea.vmem %s4, %s458
      $region48: #{temporal_mlp_forward.7} parent=43 // pred_fallthru
        _
    $region44: #{temporal_mlp_forward.7} parent=5 // pred_fallthru
      _
  $region6: #{temporal_mlp_forward.7} parent=0 // loop_footer
    %s14 = sadd.s32 1, %s10
  $region7: #{temporal_mlp_forward.7} parent=0 // loop_footer_branch
    %9 = sbr.rel target = $region3
  $region8: #{temporal_mlp_forward.7} parent=0 // loop_exit
    _

</llo_original>
